<compile_context>
chip_gen: v7x
topology: tpu7x:2x2x1
jax: 0.10.0
libtpu: 0.0.40
codegen_flags: <defaults>
</compile_context>

<pallas_src>
import jax
import jax.numpy as jnp
from jax import lax
from jax.experimental import pallas as pl
from jax.experimental.pallas import tpu as pltpu

HIDDEN = 128
D_IN = 2


def _sigmoid_tanh(x):
    # sigmoid(x) == 0.5 * (1 + tanh(x / 2)); single EUP tanh push, no exp+recip.
    return 0.5 * (1.0 + jnp.tanh(0.5 * x))


def lstm_kernel(x_ref, wih_ref, whh_ref, b_ref, hout_ref):
    """Full LSTM recurrence in one invocation.

    x_ref    : (T, B, 2)   time-major inputs
    wih_ref  : (2, 4H)     input->gates weights, gate order (i, f, o, g)
    whh_ref  : (H, 4H)     hidden->gates weights, gate order (i, f, o, g)
    b_ref    : (1, 4H)     b_ih + b_hh, gate order (i, f, o, g)
    hout_ref : (2, B, H)   hidden state at timesteps T-2 and T-1 (lane-dense)
    """
    T, B, _ = x_ref.shape
    H = HIDDEN

    # Tiny operands hoisted once (a few vregs each).
    w0 = wih_ref[0:1, :]          # (1, 4H)
    w1 = wih_ref[1:2, :]          # (1, 4H)
    bias = b_ref[...]             # (1, 4H)

    h = jnp.zeros((B, H), jnp.float32)
    c = jnp.zeros((B, H), jnp.float32)

    # T is small and static -> fully unrolled; the only serial-critical-path
    # work per step is the recurrent matmul + gate nonlinearities.
    for t in range(T):
        xt = x_ref[t]                                   # (B, 2)
        # Fused K=2 input projection: two VPU broadcast FMAs (free under MXU).
        pre = xt[:, 0:1] * w0 + xt[:, 1:2] * w1 + bias  # (B, 4H)

        # Recurrent matmul streams W_hh^T from VMEM (do not hoist 256 KiB).
        gates = pre + jnp.dot(h, whh_ref[...], preferred_element_type=jnp.float32)

        # Gate order after wrapper permutation: i, f, o, g.
        sig = _sigmoid_tanh(gates[:, : 3 * H])          # one op over (B, 3H)
        i_g = sig[:, 0 * H:1 * H]
        f_g = sig[:, 1 * H:2 * H]
        o_g = sig[:, 2 * H:3 * H]
        g_g = jnp.tanh(gates[:, 3 * H:])

        c = f_g * c + i_g * g_g
        h = o_g * jnp.tanh(c)

        if t >= T - 2:                                  # static condition (unrolled)
            hout_ref[t - (T - 2)] = h


@jax.jit
def lstm_forward(x, params):
    """x: (B, T, D_in) float32  ->  (B, 2, 1) float32  (matches Lstm.forward)."""
    B, T, Din = x.shape
    H = HIDDEN

    # Permute PyTorch gate order (i, f, g, o) -> (i, f, o, g) so the kernel can
    # apply sigmoid to one contiguous [:, :3H] slice.
    perm = jnp.concatenate([
        jnp.arange(0 * H, 1 * H),   # i
        jnp.arange(1 * H, 2 * H),   # f
        jnp.arange(3 * H, 4 * H),   # o
        jnp.arange(2 * H, 3 * H),   # g
    ])
    wih_t = params["w_ih"][perm].T.astype(jnp.float32)                 # (2, 4H)
    whh_t = params["w_hh"][perm].T.astype(jnp.float32)                 # (H, 4H)
    bias = (params["b_ih"] + params["b_hh"])[perm][None, :].astype(jnp.float32)  # (1, 4H)
    x_tm = jnp.transpose(x, (1, 0, 2)).astype(jnp.float32)             # (T, B, 2)

    h_last2 = pl.pallas_call(
        lstm_kernel,
        out_shape=jax.ShapeDtypeStruct((2, B, H), jnp.float32),
        in_specs=[
            pl.BlockSpec(memory_space=pltpu.MemorySpace.VMEM),   # x (T,B,2)
            pl.BlockSpec(memory_space=pltpu.MemorySpace.VMEM),   # W_ih^T (2,4H)
            pl.BlockSpec(memory_space=pltpu.MemorySpace.VMEM),   # W_hh^T (H,4H)
            pl.BlockSpec(memory_space=pltpu.MemorySpace.VMEM),   # bias (1,4H)
        ],
        out_specs=pl.BlockSpec(memory_space=pltpu.MemorySpace.VMEM),
    )(x_tm, wih_t, whh_t, bias)                                  # (2, B, H)

    # fc (128 -> 1) on just the last two hidden states, done by XLA in the
    # wrapper so the kernel never writes a lane-width-1 output.
    h_last2 = jnp.transpose(h_last2, (1, 0, 2))                  # (B, 2, H)
    y = h_last2 @ params["w_fc"].T + params["b_fc"]              # (B, 2, 1)
    return y


def lstm_reference(x, params):
    """Pure-JAX reference (same semantics as torch.nn.LSTM + Linear)."""
    B, T, _ = x.shape
    w_ih, w_hh = params["w_ih"], params["w_hh"]
    b = params["b_ih"] + params["b_hh"]

    def step(carry, x_t):
        h, c = carry
        gates = x_t @ w_ih.T + h @ w_hh.T + b
        i_g = jax.nn.sigmoid(gates[:, 0 * HIDDEN:1 * HIDDEN])
        f_g = jax.nn.sigmoid(gates[:, 1 * HIDDEN:2 * HIDDEN])
        g_g = jnp.tanh(gates[:, 2 * HIDDEN:3 * HIDDEN])
        o_g = jax.nn.sigmoid(gates[:, 3 * HIDDEN:4 * HIDDEN])
        c_new = f_g * c + i_g * g_g
        h_new = o_g * jnp.tanh(c_new)
        return (h_new, c_new), h_new

    h0 = jnp.zeros((B, HIDDEN), jnp.float32)
    c0 = jnp.zeros((B, HIDDEN), jnp.float32)
    _, hs = lax.scan(step, (h0, c0), jnp.transpose(x, (1, 0, 2)))  # (T, B, H)
    out = jnp.transpose(hs, (1, 0, 2))                             # (B, T, H)
    y = out @ params["w_fc"].T + params["b_fc"]
    return y[:, -2:]


def init_params(key):
    """Deterministic init matching torch default U(-1/sqrt(H), 1/sqrt(H)) shapes."""
    ks = jax.random.split(key, 6)
    s = 1.0 / jnp.sqrt(HIDDEN)
    u = lambda k, shape: jax.random.uniform(k, shape, jnp.float32, -s, s)
    return {
        "w_ih": u(ks[0], (4 * HIDDEN, D_IN)),
        "w_hh": u(ks[1], (4 * HIDDEN, HIDDEN)),
        "b_ih": u(ks[2], (4 * HIDDEN,)),
        "b_hh": u(ks[3], (4 * HIDDEN,)),
        "w_fc": u(ks[4], (1, HIDDEN)),
        "b_fc": u(ks[5], (1,)),
    }


if __name__ == "__main__":
    key = jax.random.PRNGKey(0)
    kp, kx = jax.random.split(key)
    params = init_params(kp)

    B, T = 2, 8
    x = jax.random.normal(kx, (B, T, D_IN), jnp.float32)

    y = jax.block_until_ready(lstm_forward(x, params))
    y_ref = jax.block_until_ready(lstm_reference(x, params))

    assert y.shape == (B, 2, 1), y.shape
    assert jnp.allclose(y, y_ref, atol=2e-5, rtol=2e-5), (y, y_ref)
    print("KERNEL_OK")
</pallas_src>

<mosaic_0001>
module attributes {stable_mosaic.version = 11 : i64} {
  func.func @lstm_kernel(%arg0: memref<8x2x2xf32, #tpu.memory_space<vmem>>, %arg1: memref<2x512xf32, #tpu.memory_space<vmem>>, %arg2: memref<128x512xf32, #tpu.memory_space<vmem>>, %arg3: memref<1x512xf32, #tpu.memory_space<vmem>>, %arg4: memref<2x2x128xf32, #tpu.memory_space<vmem>>) attributes {dimension_semantics = [], scalar_prefetch = 0 : i64, scratch_operands = 0 : i64, tpu.core_type = #tpu.core_type<tc>} {
    %c0 = arith.constant 0 : index
    %c0_0 = arith.constant 0 : index
    %0 = vector.load %arg1[%c0, %c0_0] : memref<2x512xf32, #tpu.memory_space<vmem>>, vector<1x512xf32>
    %c1 = arith.constant 1 : index
    %c0_1 = arith.constant 0 : index
    %1 = vector.load %arg1[%c1, %c0_1] : memref<2x512xf32, #tpu.memory_space<vmem>>, vector<1x512xf32>
    %c0_2 = arith.constant 0 : index
    %c0_3 = arith.constant 0 : index
    %2 = vector.load %arg3[%c0_2, %c0_3] : memref<1x512xf32, #tpu.memory_space<vmem>>, vector<1x512xf32>
    %cst = arith.constant 0.000000e+00 : f32
    %3 = vector.broadcast %cst : f32 to vector<2x128xf32>
    %cst_4 = arith.constant 0.000000e+00 : f32
    %4 = vector.broadcast %cst_4 : f32 to vector<2x128xf32>
    %c0_5 = arith.constant 0 : index
    %c0_6 = arith.constant 0 : index
    %c0_7 = arith.constant 0 : index
    %5 = vector.load %arg0[%c0_5, %c0_6, %c0_7] : memref<8x2x2xf32, #tpu.memory_space<vmem>>, vector<1x2x2xf32>
    %6 = vector.shape_cast %5 : vector<1x2x2xf32> to vector<2x2xf32>
    %7 = vector.extract_strided_slice %6 {offsets = [0, 0], sizes = [2, 1], strides = [1, 1]} : vector<2x2xf32> to vector<2x1xf32>
    %8 = vector.broadcast %7 : vector<2x1xf32> to vector<2x512xf32>
    %9 = vector.broadcast %0 : vector<1x512xf32> to vector<2x512xf32>
    %10 = arith.mulf %8, %9 : vector<2x512xf32>
    %11 = vector.extract_strided_slice %6 {offsets = [0, 1], sizes = [2, 1], strides = [1, 1]} : vector<2x2xf32> to vector<2x1xf32>
    %12 = vector.broadcast %11 : vector<2x1xf32> to vector<2x512xf32>
    %13 = vector.broadcast %1 : vector<1x512xf32> to vector<2x512xf32>
    %14 = arith.mulf %12, %13 : vector<2x512xf32>
    %15 = arith.addf %10, %14 : vector<2x512xf32>
    %16 = vector.broadcast %2 : vector<1x512xf32> to vector<2x512xf32>
    %17 = arith.addf %15, %16 : vector<2x512xf32>
    %c0_8 = arith.constant 0 : index
    %c0_9 = arith.constant 0 : index
    %18 = vector.load %arg2[%c0_8, %c0_9] : memref<128x512xf32, #tpu.memory_space<vmem>>, vector<128x512xf32>
    %cst_10 = arith.constant dense<0.000000e+00> : vector<2x512xf32>
    %19 = tpu.matmul %3, %18, %cst_10 {dimension_numbers = #tpu.dot_dimension_numbers<[1], [0], [0], [1], [0, 0, 1, 1], [], []>} : vector<2x128xf32>, vector<128x512xf32>, vector<2x512xf32> -> vector<2x512xf32>
    %20 = arith.addf %17, %19 : vector<2x512xf32>
    %21 = vector.extract_strided_slice %20 {offsets = [0, 0], sizes = [2, 384], strides = [1, 1]} : vector<2x512xf32> to vector<2x384xf32>
    %cst_11 = arith.constant 5.000000e-01 : f32
    %22 = vector.broadcast %cst_11 : f32 to vector<2x384xf32>
    %23 = arith.mulf %22, %21 : vector<2x384xf32>
    %24 = math.tanh %23 : vector<2x384xf32>
    %cst_12 = arith.constant 1.000000e+00 : f32
    %25 = vector.broadcast %cst_12 : f32 to vector<2x384xf32>
    %26 = arith.addf %25, %24 : vector<2x384xf32>
    %cst_13 = arith.constant 5.000000e-01 : f32
    %27 = vector.broadcast %cst_13 : f32 to vector<2x384xf32>
    %28 = arith.mulf %27, %26 : vector<2x384xf32>
    %29 = vector.extract_strided_slice %28 {offsets = [0, 0], sizes = [2, 128], strides = [1, 1]} : vector<2x384xf32> to vector<2x128xf32>
    %30 = vector.extract_strided_slice %28 {offsets = [0, 128], sizes = [2, 128], strides = [1, 1]} : vector<2x384xf32> to vector<2x128xf32>
    %31 = vector.extract_strided_slice %28 {offsets = [0, 256], sizes = [2, 128], strides = [1, 1]} : vector<2x384xf32> to vector<2x128xf32>
    %32 = vector.extract_strided_slice %20 {offsets = [0, 384], sizes = [2, 128], strides = [1, 1]} : vector<2x512xf32> to vector<2x128xf32>
    %33 = math.tanh %32 : vector<2x128xf32>
    %34 = arith.mulf %30, %4 : vector<2x128xf32>
    %35 = arith.mulf %29, %33 : vector<2x128xf32>
    %36 = arith.addf %34, %35 : vector<2x128xf32>
    %37 = math.tanh %36 : vector<2x128xf32>
    %38 = arith.mulf %31, %37 : vector<2x128xf32>
    %c1_14 = arith.constant 1 : index
    %c0_15 = arith.constant 0 : index
    %c0_16 = arith.constant 0 : index
    %39 = vector.load %arg0[%c1_14, %c0_15, %c0_16] : memref<8x2x2xf32, #tpu.memory_space<vmem>>, vector<1x2x2xf32>
    %40 = vector.shape_cast %39 : vector<1x2x2xf32> to vector<2x2xf32>
    %41 = vector.extract_strided_slice %40 {offsets = [0, 0], sizes = [2, 1], strides = [1, 1]} : vector<2x2xf32> to vector<2x1xf32>
    %42 = vector.broadcast %41 : vector<2x1xf32> to vector<2x512xf32>
    %43 = vector.broadcast %0 : vector<1x512xf32> to vector<2x512xf32>
    %44 = arith.mulf %42, %43 : vector<2x512xf32>
    %45 = vector.extract_strided_slice %40 {offsets = [0, 1], sizes = [2, 1], strides = [1, 1]} : vector<2x2xf32> to vector<2x1xf32>
    %46 = vector.broadcast %45 : vector<2x1xf32> to vector<2x512xf32>
    %47 = vector.broadcast %1 : vector<1x512xf32> to vector<2x512xf32>
    %48 = arith.mulf %46, %47 : vector<2x512xf32>
    %49 = arith.addf %44, %48 : vector<2x512xf32>
    %50 = vector.broadcast %2 : vector<1x512xf32> to vector<2x512xf32>
    %51 = arith.addf %49, %50 : vector<2x512xf32>
    %c0_17 = arith.constant 0 : index
    %c0_18 = arith.constant 0 : index
    %52 = vector.load %arg2[%c0_17, %c0_18] : memref<128x512xf32, #tpu.memory_space<vmem>>, vector<128x512xf32>
    %cst_19 = arith.constant dense<0.000000e+00> : vector<2x512xf32>
    %53 = tpu.matmul %38, %52, %cst_19 {dimension_numbers = #tpu.dot_dimension_numbers<[1], [0], [0], [1], [0, 0, 1, 1], [], []>} : vector<2x128xf32>, vector<128x512xf32>, vector<2x512xf32> -> vector<2x512xf32>
    %54 = arith.addf %51, %53 : vector<2x512xf32>
    %55 = vector.extract_strided_slice %54 {offsets = [0, 0], sizes = [2, 384], strides = [1, 1]} : vector<2x512xf32> to vector<2x384xf32>
    %cst_20 = arith.constant 5.000000e-01 : f32
    %56 = vector.broadcast %cst_20 : f32 to vector<2x384xf32>
    %57 = arith.mulf %56, %55 : vector<2x384xf32>
    %58 = math.tanh %57 : vector<2x384xf32>
    %cst_21 = arith.constant 1.000000e+00 : f32
    %59 = vector.broadcast %cst_21 : f32 to vector<2x384xf32>
    %60 = arith.addf %59, %58 : vector<2x384xf32>
    %cst_22 = arith.constant 5.000000e-01 : f32
    %61 = vector.broadcast %cst_22 : f32 to vector<2x384xf32>
    %62 = arith.mulf %61, %60 : vector<2x384xf32>
    %63 = vector.extract_strided_slice %62 {offsets = [0, 0], sizes = [2, 128], strides = [1, 1]} : vector<2x384xf32> to vector<2x128xf32>
    %64 = vector.extract_strided_slice %62 {offsets = [0, 128], sizes = [2, 128], strides = [1, 1]} : vector<2x384xf32> to vector<2x128xf32>
    %65 = vector.extract_strided_slice %62 {offsets = [0, 256], sizes = [2, 128], strides = [1, 1]} : vector<2x384xf32> to vector<2x128xf32>
    %66 = vector.extract_strided_slice %54 {offsets = [0, 384], sizes = [2, 128], strides = [1, 1]} : vector<2x512xf32> to vector<2x128xf32>
    %67 = math.tanh %66 : vector<2x128xf32>
    %68 = arith.mulf %64, %36 : vector<2x128xf32>
    %69 = arith.mulf %63, %67 : vector<2x128xf32>
    %70 = arith.addf %68, %69 : vector<2x128xf32>
    %71 = math.tanh %70 : vector<2x128xf32>
    %72 = arith.mulf %65, %71 : vector<2x128xf32>
    %c2 = arith.constant 2 : index
    %c0_23 = arith.constant 0 : index
    %c0_24 = arith.constant 0 : index
    %73 = vector.load %arg0[%c2, %c0_23, %c0_24] : memref<8x2x2xf32, #tpu.memory_space<vmem>>, vector<1x2x2xf32>
    %74 = vector.shape_cast %73 : vector<1x2x2xf32> to vector<2x2xf32>
    %75 = vector.extract_strided_slice %74 {offsets = [0, 0], sizes = [2, 1], strides = [1, 1]} : vector<2x2xf32> to vector<2x1xf32>
    %76 = vector.broadcast %75 : vector<2x1xf32> to vector<2x512xf32>
    %77 = vector.broadcast %0 : vector<1x512xf32> to vector<2x512xf32>
    %78 = arith.mulf %76, %77 : vector<2x512xf32>
    %79 = vector.extract_strided_slice %74 {offsets = [0, 1], sizes = [2, 1], strides = [1, 1]} : vector<2x2xf32> to vector<2x1xf32>
    %80 = vector.broadcast %79 : vector<2x1xf32> to vector<2x512xf32>
    %81 = vector.broadcast %1 : vector<1x512xf32> to vector<2x512xf32>
    %82 = arith.mulf %80, %81 : vector<2x512xf32>
    %83 = arith.addf %78, %82 : vector<2x512xf32>
    %84 = vector.broadcast %2 : vector<1x512xf32> to vector<2x512xf32>
    %85 = arith.addf %83, %84 : vector<2x512xf32>
    %c0_25 = arith.constant 0 : index
    %c0_26 = arith.constant 0 : index
    %86 = vector.load %arg2[%c0_25, %c0_26] : memref<128x512xf32, #tpu.memory_space<vmem>>, vector<128x512xf32>
    %cst_27 = arith.constant dense<0.000000e+00> : vector<2x512xf32>
    %87 = tpu.matmul %72, %86, %cst_27 {dimension_numbers = #tpu.dot_dimension_numbers<[1], [0], [0], [1], [0, 0, 1, 1], [], []>} : vector<2x128xf32>, vector<128x512xf32>, vector<2x512xf32> -> vector<2x512xf32>
    %88 = arith.addf %85, %87 : vector<2x512xf32>
    %89 = vector.extract_strided_slice %88 {offsets = [0, 0], sizes = [2, 384], strides = [1, 1]} : vector<2x512xf32> to vector<2x384xf32>
    %cst_28 = arith.constant 5.000000e-01 : f32
    %90 = vector.broadcast %cst_28 : f32 to vector<2x384xf32>
    %91 = arith.mulf %90, %89 : vector<2x384xf32>
    %92 = math.tanh %91 : vector<2x384xf32>
    %cst_29 = arith.constant 1.000000e+00 : f32
    %93 = vector.broadcast %cst_29 : f32 to vector<2x384xf32>
    %94 = arith.addf %93, %92 : vector<2x384xf32>
    %cst_30 = arith.constant 5.000000e-01 : f32
    %95 = vector.broadcast %cst_30 : f32 to vector<2x384xf32>
    %96 = arith.mulf %95, %94 : vector<2x384xf32>
    %97 = vector.extract_strided_slice %96 {offsets = [0, 0], sizes = [2, 128], strides = [1, 1]} : vector<2x384xf32> to vector<2x128xf32>
    %98 = vector.extract_strided_slice %96 {offsets = [0, 128], sizes = [2, 128], strides = [1, 1]} : vector<2x384xf32> to vector<2x128xf32>
    %99 = vector.extract_strided_slice %96 {offsets = [0, 256], sizes = [2, 128], strides = [1, 1]} : vector<2x384xf32> to vector<2x128xf32>
    %100 = vector.extract_strided_slice %88 {offsets = [0, 384], sizes = [2, 128], strides = [1, 1]} : vector<2x512xf32> to vector<2x128xf32>
    %101 = math.tanh %100 : vector<2x128xf32>
    %102 = arith.mulf %98, %70 : vector<2x128xf32>
    %103 = arith.mulf %97, %101 : vector<2x128xf32>
    %104 = arith.addf %102, %103 : vector<2x128xf32>
    %105 = math.tanh %104 : vector<2x128xf32>
    %106 = arith.mulf %99, %105 : vector<2x128xf32>
    %c3 = arith.constant 3 : index
    %c0_31 = arith.constant 0 : index
    %c0_32 = arith.constant 0 : index
    %107 = vector.load %arg0[%c3, %c0_31, %c0_32] : memref<8x2x2xf32, #tpu.memory_space<vmem>>, vector<1x2x2xf32>
    %108 = vector.shape_cast %107 : vector<1x2x2xf32> to vector<2x2xf32>
    %109 = vector.extract_strided_slice %108 {offsets = [0, 0], sizes = [2, 1], strides = [1, 1]} : vector<2x2xf32> to vector<2x1xf32>
    %110 = vector.broadcast %109 : vector<2x1xf32> to vector<2x512xf32>
    %111 = vector.broadcast %0 : vector<1x512xf32> to vector<2x512xf32>
    %112 = arith.mulf %110, %111 : vector<2x512xf32>
    %113 = vector.extract_strided_slice %108 {offsets = [0, 1], sizes = [2, 1], strides = [1, 1]} : vector<2x2xf32> to vector<2x1xf32>
    %114 = vector.broadcast %113 : vector<2x1xf32> to vector<2x512xf32>
    %115 = vector.broadcast %1 : vector<1x512xf32> to vector<2x512xf32>
    %116 = arith.mulf %114, %115 : vector<2x512xf32>
    %117 = arith.addf %112, %116 : vector<2x512xf32>
    %118 = vector.broadcast %2 : vector<1x512xf32> to vector<2x512xf32>
    %119 = arith.addf %117, %118 : vector<2x512xf32>
    %c0_33 = arith.constant 0 : index
    %c0_34 = arith.constant 0 : index
    %120 = vector.load %arg2[%c0_33, %c0_34] : memref<128x512xf32, #tpu.memory_space<vmem>>, vector<128x512xf32>
    %cst_35 = arith.constant dense<0.000000e+00> : vector<2x512xf32>
    %121 = tpu.matmul %106, %120, %cst_35 {dimension_numbers = #tpu.dot_dimension_numbers<[1], [0], [0], [1], [0, 0, 1, 1], [], []>} : vector<2x128xf32>, vector<128x512xf32>, vector<2x512xf32> -> vector<2x512xf32>
    %122 = arith.addf %119, %121 : vector<2x512xf32>
    %123 = vector.extract_strided_slice %122 {offsets = [0, 0], sizes = [2, 384], strides = [1, 1]} : vector<2x512xf32> to vector<2x384xf32>
    %cst_36 = arith.constant 5.000000e-01 : f32
    %124 = vector.broadcast %cst_36 : f32 to vector<2x384xf32>
    %125 = arith.mulf %124, %123 : vector<2x384xf32>
    %126 = math.tanh %125 : vector<2x384xf32>
    %cst_37 = arith.constant 1.000000e+00 : f32
    %127 = vector.broadcast %cst_37 : f32 to vector<2x384xf32>
    %128 = arith.addf %127, %126 : vector<2x384xf32>
    %cst_38 = arith.constant 5.000000e-01 : f32
    %129 = vector.broadcast %cst_38 : f32 to vector<2x384xf32>
    %130 = arith.mulf %129, %128 : vector<2x384xf32>
    %131 = vector.extract_strided_slice %130 {offsets = [0, 0], sizes = [2, 128], strides = [1, 1]} : vector<2x384xf32> to vector<2x128xf32>
    %132 = vector.extract_strided_slice %130 {offsets = [0, 128], sizes = [2, 128], strides = [1, 1]} : vector<2x384xf32> to vector<2x128xf32>
    %133 = vector.extract_strided_slice %130 {offsets = [0, 256], sizes = [2, 128], strides = [1, 1]} : vector<2x384xf32> to vector<2x128xf32>
    %134 = vector.extract_strided_slice %122 {offsets = [0, 384], sizes = [2, 128], strides = [1, 1]} : vector<2x512xf32> to vector<2x128xf32>
    %135 = math.tanh %134 : vector<2x128xf32>
    %136 = arith.mulf %132, %104 : vector<2x128xf32>
    %137 = arith.mulf %131, %135 : vector<2x128xf32>
    %138 = arith.addf %136, %137 : vector<2x128xf32>
    %139 = math.tanh %138 : vector<2x128xf32>
    %140 = arith.mulf %133, %139 : vector<2x128xf32>
    %c4 = arith.constant 4 : index
    %c0_39 = arith.constant 0 : index
    %c0_40 = arith.constant 0 : index
    %141 = vector.load %arg0[%c4, %c0_39, %c0_40] : memref<8x2x2xf32, #tpu.memory_space<vmem>>, vector<1x2x2xf32>
    %142 = vector.shape_cast %141 : vector<1x2x2xf32> to vector<2x2xf32>
    %143 = vector.extract_strided_slice %142 {offsets = [0, 0], sizes = [2, 1], strides = [1, 1]} : vector<2x2xf32> to vector<2x1xf32>
    %144 = vector.broadcast %143 : vector<2x1xf32> to vector<2x512xf32>
    %145 = vector.broadcast %0 : vector<1x512xf32> to vector<2x512xf32>
    %146 = arith.mulf %144, %145 : vector<2x512xf32>
    %147 = vector.extract_strided_slice %142 {offsets = [0, 1], sizes = [2, 1], strides = [1, 1]} : vector<2x2xf32> to vector<2x1xf32>
    %148 = vector.broadcast %147 : vector<2x1xf32> to vector<2x512xf32>
    %149 = vector.broadcast %1 : vector<1x512xf32> to vector<2x512xf32>
    %150 = arith.mulf %148, %149 : vector<2x512xf32>
    %151 = arith.addf %146, %150 : vector<2x512xf32>
    %152 = vector.broadcast %2 : vector<1x512xf32> to vector<2x512xf32>
    %153 = arith.addf %151, %152 : vector<2x512xf32>
    %c0_41 = arith.constant 0 : index
    %c0_42 = arith.constant 0 : index
    %154 = vector.load %arg2[%c0_41, %c0_42] : memref<128x512xf32, #tpu.memory_space<vmem>>, vector<128x512xf32>
    %cst_43 = arith.constant dense<0.000000e+00> : vector<2x512xf32>
    %155 = tpu.matmul %140, %154, %cst_43 {dimension_numbers = #tpu.dot_dimension_numbers<[1], [0], [0], [1], [0, 0, 1, 1], [], []>} : vector<2x128xf32>, vector<128x512xf32>, vector<2x512xf32> -> vector<2x512xf32>
    %156 = arith.addf %153, %155 : vector<2x512xf32>
    %157 = vector.extract_strided_slice %156 {offsets = [0, 0], sizes = [2, 384], strides = [1, 1]} : vector<2x512xf32> to vector<2x384xf32>
    %cst_44 = arith.constant 5.000000e-01 : f32
    %158 = vector.broadcast %cst_44 : f32 to vector<2x384xf32>
    %159 = arith.mulf %158, %157 : vector<2x384xf32>
    %160 = math.tanh %159 : vector<2x384xf32>
    %cst_45 = arith.constant 1.000000e+00 : f32
    %161 = vector.broadcast %cst_45 : f32 to vector<2x384xf32>
    %162 = arith.addf %161, %160 : vector<2x384xf32>
    %cst_46 = arith.constant 5.000000e-01 : f32
    %163 = vector.broadcast %cst_46 : f32 to vector<2x384xf32>
    %164 = arith.mulf %163, %162 : vector<2x384xf32>
    %165 = vector.extract_strided_slice %164 {offsets = [0, 0], sizes = [2, 128], strides = [1, 1]} : vector<2x384xf32> to vector<2x128xf32>
    %166 = vector.extract_strided_slice %164 {offsets = [0, 128], sizes = [2, 128], strides = [1, 1]} : vector<2x384xf32> to vector<2x128xf32>
    %167 = vector.extract_strided_slice %164 {offsets = [0, 256], sizes = [2, 128], strides = [1, 1]} : vector<2x384xf32> to vector<2x128xf32>
    %168 = vector.extract_strided_slice %156 {offsets = [0, 384], sizes = [2, 128], strides = [1, 1]} : vector<2x512xf32> to vector<2x128xf32>
    %169 = math.tanh %168 : vector<2x128xf32>
    %170 = arith.mulf %166, %138 : vector<2x128xf32>
    %171 = arith.mulf %165, %169 : vector<2x128xf32>
    %172 = arith.addf %170, %171 : vector<2x128xf32>
    %173 = math.tanh %172 : vector<2x128xf32>
    %174 = arith.mulf %167, %173 : vector<2x128xf32>
    %c5 = arith.constant 5 : index
    %c0_47 = arith.constant 0 : index
    %c0_48 = arith.constant 0 : index
    %175 = vector.load %arg0[%c5, %c0_47, %c0_48] : memref<8x2x2xf32, #tpu.memory_space<vmem>>, vector<1x2x2xf32>
    %176 = vector.shape_cast %175 : vector<1x2x2xf32> to vector<2x2xf32>
    %177 = vector.extract_strided_slice %176 {offsets = [0, 0], sizes = [2, 1], strides = [1, 1]} : vector<2x2xf32> to vector<2x1xf32>
    %178 = vector.broadcast %177 : vector<2x1xf32> to vector<2x512xf32>
    %179 = vector.broadcast %0 : vector<1x512xf32> to vector<2x512xf32>
    %180 = arith.mulf %178, %179 : vector<2x512xf32>
    %181 = vector.extract_strided_slice %176 {offsets = [0, 1], sizes = [2, 1], strides = [1, 1]} : vector<2x2xf32> to vector<2x1xf32>
    %182 = vector.broadcast %181 : vector<2x1xf32> to vector<2x512xf32>
    %183 = vector.broadcast %1 : vector<1x512xf32> to vector<2x512xf32>
    %184 = arith.mulf %182, %183 : vector<2x512xf32>
    %185 = arith.addf %180, %184 : vector<2x512xf32>
    %186 = vector.broadcast %2 : vector<1x512xf32> to vector<2x512xf32>
    %187 = arith.addf %185, %186 : vector<2x512xf32>
    %c0_49 = arith.constant 0 : index
    %c0_50 = arith.constant 0 : index
    %188 = vector.load %arg2[%c0_49, %c0_50] : memref<128x512xf32, #tpu.memory_space<vmem>>, vector<128x512xf32>
    %cst_51 = arith.constant dense<0.000000e+00> : vector<2x512xf32>
    %189 = tpu.matmul %174, %188, %cst_51 {dimension_numbers = #tpu.dot_dimension_numbers<[1], [0], [0], [1], [0, 0, 1, 1], [], []>} : vector<2x128xf32>, vector<128x512xf32>, vector<2x512xf32> -> vector<2x512xf32>
    %190 = arith.addf %187, %189 : vector<2x512xf32>
    %191 = vector.extract_strided_slice %190 {offsets = [0, 0], sizes = [2, 384], strides = [1, 1]} : vector<2x512xf32> to vector<2x384xf32>
    %cst_52 = arith.constant 5.000000e-01 : f32
    %192 = vector.broadcast %cst_52 : f32 to vector<2x384xf32>
    %193 = arith.mulf %192, %191 : vector<2x384xf32>
    %194 = math.tanh %193 : vector<2x384xf32>
    %cst_53 = arith.constant 1.000000e+00 : f32
    %195 = vector.broadcast %cst_53 : f32 to vector<2x384xf32>
    %196 = arith.addf %195, %194 : vector<2x384xf32>
    %cst_54 = arith.constant 5.000000e-01 : f32
    %197 = vector.broadcast %cst_54 : f32 to vector<2x384xf32>
    %198 = arith.mulf %197, %196 : vector<2x384xf32>
    %199 = vector.extract_strided_slice %198 {offsets = [0, 0], sizes = [2, 128], strides = [1, 1]} : vector<2x384xf32> to vector<2x128xf32>
    %200 = vector.extract_strided_slice %198 {offsets = [0, 128], sizes = [2, 128], strides = [1, 1]} : vector<2x384xf32> to vector<2x128xf32>
    %201 = vector.extract_strided_slice %198 {offsets = [0, 256], sizes = [2, 128], strides = [1, 1]} : vector<2x384xf32> to vector<2x128xf32>
    %202 = vector.extract_strided_slice %190 {offsets = [0, 384], sizes = [2, 128], strides = [1, 1]} : vector<2x512xf32> to vector<2x128xf32>
    %203 = math.tanh %202 : vector<2x128xf32>
    %204 = arith.mulf %200, %172 : vector<2x128xf32>
    %205 = arith.mulf %199, %203 : vector<2x128xf32>
    %206 = arith.addf %204, %205 : vector<2x128xf32>
    %207 = math.tanh %206 : vector<2x128xf32>
    %208 = arith.mulf %201, %207 : vector<2x128xf32>
    %c6 = arith.constant 6 : index
    %c0_55 = arith.constant 0 : index
    %c0_56 = arith.constant 0 : index
    %209 = vector.load %arg0[%c6, %c0_55, %c0_56] : memref<8x2x2xf32, #tpu.memory_space<vmem>>, vector<1x2x2xf32>
    %210 = vector.shape_cast %209 : vector<1x2x2xf32> to vector<2x2xf32>
    %211 = vector.extract_strided_slice %210 {offsets = [0, 0], sizes = [2, 1], strides = [1, 1]} : vector<2x2xf32> to vector<2x1xf32>
    %212 = vector.broadcast %211 : vector<2x1xf32> to vector<2x512xf32>
    %213 = vector.broadcast %0 : vector<1x512xf32> to vector<2x512xf32>
    %214 = arith.mulf %212, %213 : vector<2x512xf32>
    %215 = vector.extract_strided_slice %210 {offsets = [0, 1], sizes = [2, 1], strides = [1, 1]} : vector<2x2xf32> to vector<2x1xf32>
    %216 = vector.broadcast %215 : vector<2x1xf32> to vector<2x512xf32>
    %217 = vector.broadcast %1 : vector<1x512xf32> to vector<2x512xf32>
    %218 = arith.mulf %216, %217 : vector<2x512xf32>
    %219 = arith.addf %214, %218 : vector<2x512xf32>
    %220 = vector.broadcast %2 : vector<1x512xf32> to vector<2x512xf32>
    %221 = arith.addf %219, %220 : vector<2x512xf32>
    %c0_57 = arith.constant 0 : index
    %c0_58 = arith.constant 0 : index
    %222 = vector.load %arg2[%c0_57, %c0_58] : memref<128x512xf32, #tpu.memory_space<vmem>>, vector<128x512xf32>
    %cst_59 = arith.constant dense<0.000000e+00> : vector<2x512xf32>
    %223 = tpu.matmul %208, %222, %cst_59 {dimension_numbers = #tpu.dot_dimension_numbers<[1], [0], [0], [1], [0, 0, 1, 1], [], []>} : vector<2x128xf32>, vector<128x512xf32>, vector<2x512xf32> -> vector<2x512xf32>
    %224 = arith.addf %221, %223 : vector<2x512xf32>
    %225 = vector.extract_strided_slice %224 {offsets = [0, 0], sizes = [2, 384], strides = [1, 1]} : vector<2x512xf32> to vector<2x384xf32>
    %cst_60 = arith.constant 5.000000e-01 : f32
    %226 = vector.broadcast %cst_60 : f32 to vector<2x384xf32>
    %227 = arith.mulf %226, %225 : vector<2x384xf32>
    %228 = math.tanh %227 : vector<2x384xf32>
    %cst_61 = arith.constant 1.000000e+00 : f32
    %229 = vector.broadcast %cst_61 : f32 to vector<2x384xf32>
    %230 = arith.addf %229, %228 : vector<2x384xf32>
    %cst_62 = arith.constant 5.000000e-01 : f32
    %231 = vector.broadcast %cst_62 : f32 to vector<2x384xf32>
    %232 = arith.mulf %231, %230 : vector<2x384xf32>
    %233 = vector.extract_strided_slice %232 {offsets = [0, 0], sizes = [2, 128], strides = [1, 1]} : vector<2x384xf32> to vector<2x128xf32>
    %234 = vector.extract_strided_slice %232 {offsets = [0, 128], sizes = [2, 128], strides = [1, 1]} : vector<2x384xf32> to vector<2x128xf32>
    %235 = vector.extract_strided_slice %232 {offsets = [0, 256], sizes = [2, 128], strides = [1, 1]} : vector<2x384xf32> to vector<2x128xf32>
    %236 = vector.extract_strided_slice %224 {offsets = [0, 384], sizes = [2, 128], strides = [1, 1]} : vector<2x512xf32> to vector<2x128xf32>
    %237 = math.tanh %236 : vector<2x128xf32>
    %238 = arith.mulf %234, %206 : vector<2x128xf32>
    %239 = arith.mulf %233, %237 : vector<2x128xf32>
    %240 = arith.addf %238, %239 : vector<2x128xf32>
    %241 = math.tanh %240 : vector<2x128xf32>
    %242 = arith.mulf %235, %241 : vector<2x128xf32>
    %c0_63 = arith.constant 0 : index
    %c0_64 = arith.constant 0 : index
    %c0_65 = arith.constant 0 : index
    %243 = vector.load %arg4[%c0_63, %c0_64, %c0_65] : memref<2x2x128xf32, #tpu.memory_space<vmem>>, vector<1x2x128xf32>
    %244 = vector.shape_cast %243 : vector<1x2x128xf32> to vector<2x128xf32>
    %245 = vector.shape_cast %242 : vector<2x128xf32> to vector<1x2x128xf32>
    tpu.vector_store %arg4[%c0_63, %c0_64, %c0_65], %245 {strides = array<i32>} : memref<2x2x128xf32, #tpu.memory_space<vmem>>, vector<1x2x128xf32>,
    %c7 = arith.constant 7 : index
    %c0_66 = arith.constant 0 : index
    %c0_67 = arith.constant 0 : index
    %246 = vector.load %arg0[%c7, %c0_66, %c0_67] : memref<8x2x2xf32, #tpu.memory_space<vmem>>, vector<1x2x2xf32>
    %247 = vector.shape_cast %246 : vector<1x2x2xf32> to vector<2x2xf32>
    %248 = vector.extract_strided_slice %247 {offsets = [0, 0], sizes = [2, 1], strides = [1, 1]} : vector<2x2xf32> to vector<2x1xf32>
    %249 = vector.broadcast %248 : vector<2x1xf32> to vector<2x512xf32>
    %250 = vector.broadcast %0 : vector<1x512xf32> to vector<2x512xf32>
    %251 = arith.mulf %249, %250 : vector<2x512xf32>
    %252 = vector.extract_strided_slice %247 {offsets = [0, 1], sizes = [2, 1], strides = [1, 1]} : vector<2x2xf32> to vector<2x1xf32>
    %253 = vector.broadcast %252 : vector<2x1xf32> to vector<2x512xf32>
    %254 = vector.broadcast %1 : vector<1x512xf32> to vector<2x512xf32>
    %255 = arith.mulf %253, %254 : vector<2x512xf32>
    %256 = arith.addf %251, %255 : vector<2x512xf32>
    %257 = vector.broadcast %2 : vector<1x512xf32> to vector<2x512xf32>
    %258 = arith.addf %256, %257 : vector<2x512xf32>
    %c0_68 = arith.constant 0 : index
    %c0_69 = arith.constant 0 : index
    %259 = vector.load %arg2[%c0_68, %c0_69] : memref<128x512xf32, #tpu.memory_space<vmem>>, vector<128x512xf32>
    %cst_70 = arith.constant dense<0.000000e+00> : vector<2x512xf32>
    %260 = tpu.matmul %242, %259, %cst_70 {dimension_numbers = #tpu.dot_dimension_numbers<[1], [0], [0], [1], [0, 0, 1, 1], [], []>} : vector<2x128xf32>, vector<128x512xf32>, vector<2x512xf32> -> vector<2x512xf32>
    %261 = arith.addf %258, %260 : vector<2x512xf32>
    %262 = vector.extract_strided_slice %261 {offsets = [0, 0], sizes = [2, 384], strides = [1, 1]} : vector<2x512xf32> to vector<2x384xf32>
    %cst_71 = arith.constant 5.000000e-01 : f32
    %263 = vector.broadcast %cst_71 : f32 to vector<2x384xf32>
    %264 = arith.mulf %263, %262 : vector<2x384xf32>
    %265 = math.tanh %264 : vector<2x384xf32>
    %cst_72 = arith.constant 1.000000e+00 : f32
    %266 = vector.broadcast %cst_72 : f32 to vector<2x384xf32>
    %267 = arith.addf %266, %265 : vector<2x384xf32>
    %cst_73 = arith.constant 5.000000e-01 : f32
    %268 = vector.broadcast %cst_73 : f32 to vector<2x384xf32>
    %269 = arith.mulf %268, %267 : vector<2x384xf32>
    %270 = vector.extract_strided_slice %269 {offsets = [0, 0], sizes = [2, 128], strides = [1, 1]} : vector<2x384xf32> to vector<2x128xf32>
    %271 = vector.extract_strided_slice %269 {offsets = [0, 128], sizes = [2, 128], strides = [1, 1]} : vector<2x384xf32> to vector<2x128xf32>
    %272 = vector.extract_strided_slice %269 {offsets = [0, 256], sizes = [2, 128], strides = [1, 1]} : vector<2x384xf32> to vector<2x128xf32>
    %273 = vector.extract_strided_slice %261 {offsets = [0, 384], sizes = [2, 128], strides = [1, 1]} : vector<2x512xf32> to vector<2x128xf32>
    %274 = math.tanh %273 : vector<2x128xf32>
    %275 = arith.mulf %271, %240 : vector<2x128xf32>
    %276 = arith.mulf %270, %274 : vector<2x128xf32>
    %277 = arith.addf %275, %276 : vector<2x128xf32>
    %278 = math.tanh %277 : vector<2x128xf32>
    %279 = arith.mulf %272, %278 : vector<2x128xf32>
    %c1_74 = arith.constant 1 : index
    %c0_75 = arith.constant 0 : index
    %c0_76 = arith.constant 0 : index
    %280 = vector.load %arg4[%c1_74, %c0_75, %c0_76] : memref<2x2x128xf32, #tpu.memory_space<vmem>>, vector<1x2x128xf32>
    %281 = vector.shape_cast %280 : vector<1x2x128xf32> to vector<2x128xf32>
    %282 = vector.shape_cast %279 : vector<2x128xf32> to vector<1x2x128xf32>
    tpu.vector_store %arg4[%c1_74, %c0_75, %c0_76], %282 {strides = array<i32>} : memref<2x2x128xf32, #tpu.memory_space<vmem>>, vector<1x2x128xf32>,
    return
  }
}

</mosaic_0001>

<llo_original>
// kernel: lstm_forward.1
$region0: #{lstm_forward.1}
  #allocation0 [shape = 'u32[]', space=smem, size = 0x4, offset = 0x4, fixed_abs, tag = 'smem constant byte address 0x4 - core index']
  #allocation1 [shape = 'u32[144,128]{1,0:T(1,128)}', space=vmem, size = 0x12000, scoped, tag = 'internal scratch']
  %s0 = inlined_call_operand.vmem [shape: f32[8,2,2], index: 0, kind: input, shape index: {}]
  %s1 = inlined_call_operand.vmem [shape: f32[2,512], index: 1, kind: input, shape index: {}]
  %s2 = inlined_call_operand.vmem [shape: f32[128,512], index: 2, kind: input, shape index: {}]
  %s3 = inlined_call_operand.vmem [shape: f32[1,512], index: 3, kind: input, shape index: {}]
  %s4 = inlined_call_operand.vmem [shape: f32[2,2,128], index: 4, kind: output, shape index: {}]
  %s5 = sld [smem:[#allocation0]]
  $region26: #{lstm_forward.1} parent=0
    _
  %s7 = ssub.s32 1, %s5
  %s8 = scalar_select 0, %s7, %s5
  // Predicated region
  $region2: #{lstm_forward.1} parent=0 // pred_check
    _
  $region3: #{lstm_forward.1} parent=0 // pred_check_branch
    %10 = sbr.rel (0) target = $region5
  $region4: #{lstm_forward.1} parent=0 // pred_region
    _
  $region5: #{lstm_forward.1} parent=0 // pred_fallthru
    _
  // Predicated region
  $region6: #{lstm_forward.1} parent=0 // pred_check
    _
  $region7: #{lstm_forward.1} parent=0 // pred_check_branch
    %12 = sbr.rel (0) target = $region9
  $region8: #{lstm_forward.1} parent=0 // pred_region
    _
  $region9: #{lstm_forward.1} parent=0 // pred_fallthru
    _
  // Predicated region
  $region10: #{lstm_forward.1} parent=0 // pred_check
    _
  $region11: #{lstm_forward.1} parent=0 // pred_check_branch
    %14 = sbr.rel (0) target = $region13
  $region12: #{lstm_forward.1} parent=0 // pred_region
    _
  $region13: #{lstm_forward.1} parent=0 // pred_fallthru
    _
  // Predicated region
  $region14: #{lstm_forward.1} parent=0 // pred_check
    _
  $region15: #{lstm_forward.1} parent=0 // pred_check_branch
    %16 = sbr.rel (0) target = $region17
  $region16: #{lstm_forward.1} parent=0 // pred_region
    _
  $region17: #{lstm_forward.1} parent=0 // pred_fallthru
    _
  %v17 = vld [vmem:[%s1] ss:$2 sm:$0xf]
  %s18 = scalar_lea.vmem %s1, 1
  %v19 = vld [vmem:[%s18] ss:$2 sm:$0xf]
  %v20 = vld [vmem:[%s3] sm:$0xf]
  %v21 = vld [vmem:[%s0] sm:$0x3]
  %23 = vset.pattern.permute.xlu0 0
  %24 = vperm.xlu0 %23, %v21
  %v25 = vpop.permute.xlu0 %24
  %v28 = vlaneseq
  %v29 = vshrl.u32 %v28, 7
  %v30 = vsub.s32 0, %v29
  %v31 = vrot.slane %v17, %v30
  %v32 = vlaneseq
  %v33 = vshrl.u32 %v32, 7
  %v34 = vsub.s32 1, %v33
  %v35 = vrot.slane %v17, %v34
  %v36 = vlaneseq
  %v37 = vshrl.u32 %v36, 7
  %v38 = vsub.s32 2, %v37
  %v39 = vrot.slane %v17, %v38
  %v40 = vlaneseq
  %v41 = vshrl.u32 %v40, 7
  %v42 = vsub.s32 3, %v41
  %v43 = vrot.slane %v17, %v42
  %v48 = vmul.f32 %v25, %v31
  %v49 = vmul.f32 %v25, %v35
  %v50 = vmul.f32 %v25, %v39
  %v51 = vmul.f32 %v25, %v43
  %52 = vset.pattern.permute.xlu0 1
  %53 = vperm.xlu0 %52, %v21
  %v54 = vpop.permute.xlu0 %53
  %v57 = vlaneseq
  %v58 = vshrl.u32 %v57, 7
  %v59 = vsub.s32 0, %v58
  %v60 = vrot.slane %v19, %v59
  %v61 = vlaneseq
  %v62 = vshrl.u32 %v61, 7
  %v63 = vsub.s32 1, %v62
  %v64 = vrot.slane %v19, %v63
  %v65 = vlaneseq
  %v66 = vshrl.u32 %v65, 7
  %v67 = vsub.s32 2, %v66
  %v68 = vrot.slane %v19, %v67
  %v69 = vlaneseq
  %v70 = vshrl.u32 %v69, 7
  %v71 = vsub.s32 3, %v70
  %v72 = vrot.slane %v19, %v71
  %v77 = vmul.f32 %v54, %v60
  %v78 = vmul.f32 %v54, %v64
  %v79 = vmul.f32 %v54, %v68
  %v80 = vmul.f32 %v54, %v72
  %v81 = vadd.f32 %v48, %v77
  %v82 = vadd.f32 %v49, %v78
  %v83 = vadd.f32 %v50, %v79
  %v84 = vadd.f32 %v51, %v80
  %v86 = vlaneseq
  %v87 = vshrl.u32 %v86, 7
  %v88 = vsub.s32 0, %v87
  %v89 = vrot.slane %v20, %v88
  %v90 = vlaneseq
  %v91 = vshrl.u32 %v90, 7
  %v92 = vsub.s32 1, %v91
  %v93 = vrot.slane %v20, %v92
  %v94 = vlaneseq
  %v95 = vshrl.u32 %v94, 7
  %v96 = vsub.s32 2, %v95
  %v97 = vrot.slane %v20, %v96
  %v98 = vlaneseq
  %v99 = vshrl.u32 %v98, 7
  %v100 = vsub.s32 3, %v99
  %v101 = vrot.slane %v20, %v100
  %v106 = vadd.f32 %v81, %v89
  %v107 = vadd.f32 %v82, %v93
  %v108 = vadd.f32 %v83, %v97
  %v109 = vadd.f32 %v84, %v101
  %v110 = vld [vmem:[%s2] sm:$0xff]
  %v111 = vld [vmem:[%s2 + $0x8] sm:$0xff]
  %v112 = vld [vmem:[%s2 + $0x10] sm:$0xff]
  %v113 = vld [vmem:[%s2 + $0x18] sm:$0xff]
  %v114 = vld [vmem:[%s2 + $0x20] sm:$0xff]
  %v115 = vld [vmem:[%s2 + $0x28] sm:$0xff]
  %v116 = vld [vmem:[%s2 + $0x30] sm:$0xff]
  %v117 = vld [vmem:[%s2 + $0x38] sm:$0xff]
  %v118 = vld [vmem:[%s2 + $0x40] sm:$0xff]
  %v119 = vld [vmem:[%s2 + $0x48] sm:$0xff]
  %v120 = vld [vmem:[%s2 + $0x50] sm:$0xff]
  %v121 = vld [vmem:[%s2 + $0x58] sm:$0xff]
  %v122 = vld [vmem:[%s2 + $0x60] sm:$0xff]
  %v123 = vld [vmem:[%s2 + $0x68] sm:$0xff]
  %v124 = vld [vmem:[%s2 + $0x70] sm:$0xff]
  %v125 = vld [vmem:[%s2 + $0x78] sm:$0xff]
  %v126 = vld [vmem:[%s2 + $0x80] sm:$0xff]
  %v127 = vld [vmem:[%s2 + $0x88] sm:$0xff]
  %v128 = vld [vmem:[%s2 + $0x90] sm:$0xff]
  %v129 = vld [vmem:[%s2 + $0x98] sm:$0xff]
  %v130 = vld [vmem:[%s2 + $0xa0] sm:$0xff]
  %v131 = vld [vmem:[%s2 + $0xa8] sm:$0xff]
  %v132 = vld [vmem:[%s2 + $0xb0] sm:$0xff]
  %v133 = vld [vmem:[%s2 + $0xb8] sm:$0xff]
  %v134 = vld [vmem:[%s2 + $0xc0] sm:$0xff]
  %v135 = vld [vmem:[%s2 + $0xc8] sm:$0xff]
  %v136 = vld [vmem:[%s2 + $0xd0] sm:$0xff]
  %v137 = vld [vmem:[%s2 + $0xd8] sm:$0xff]
  %v138 = vld [vmem:[%s2 + $0xe0] sm:$0xff]
  %v139 = vld [vmem:[%s2 + $0xe8] sm:$0xff]
  %v140 = vld [vmem:[%s2 + $0xf0] sm:$0xff]
  %v141 = vld [vmem:[%s2 + $0xf8] sm:$0xff]
  %v142 = vld [vmem:[%s2 + $0x100] sm:$0xff]
  %v143 = vld [vmem:[%s2 + $0x108] sm:$0xff]
  %v144 = vld [vmem:[%s2 + $0x110] sm:$0xff]
  %v145 = vld [vmem:[%s2 + $0x118] sm:$0xff]
  %v146 = vld [vmem:[%s2 + $0x120] sm:$0xff]
  %v147 = vld [vmem:[%s2 + $0x128] sm:$0xff]
  %v148 = vld [vmem:[%s2 + $0x130] sm:$0xff]
  %v149 = vld [vmem:[%s2 + $0x138] sm:$0xff]
  %v150 = vld [vmem:[%s2 + $0x140] sm:$0xff]
  %v151 = vld [vmem:[%s2 + $0x148] sm:$0xff]
  %v152 = vld [vmem:[%s2 + $0x150] sm:$0xff]
  %v153 = vld [vmem:[%s2 + $0x158] sm:$0xff]
  %v154 = vld [vmem:[%s2 + $0x160] sm:$0xff]
  %v155 = vld [vmem:[%s2 + $0x168] sm:$0xff]
  %v156 = vld [vmem:[%s2 + $0x170] sm:$0xff]
  %v157 = vld [vmem:[%s2 + $0x178] sm:$0xff]
  %v158 = vld [vmem:[%s2 + $0x180] sm:$0xff]
  %v159 = vld [vmem:[%s2 + $0x188] sm:$0xff]
  %v160 = vld [vmem:[%s2 + $0x190] sm:$0xff]
  %v161 = vld [vmem:[%s2 + $0x198] sm:$0xff]
  %v162 = vld [vmem:[%s2 + $0x1a0] sm:$0xff]
  %v163 = vld [vmem:[%s2 + $0x1a8] sm:$0xff]
  %v164 = vld [vmem:[%s2 + $0x1b0] sm:$0xff]
  %v165 = vld [vmem:[%s2 + $0x1b8] sm:$0xff]
  %v166 = vld [vmem:[%s2 + $0x1c0] sm:$0xff]
  %v167 = vld [vmem:[%s2 + $0x1c8] sm:$0xff]
  %v168 = vld [vmem:[%s2 + $0x1d0] sm:$0xff]
  %v169 = vld [vmem:[%s2 + $0x1d8] sm:$0xff]
  %v170 = vld [vmem:[%s2 + $0x1e0] sm:$0xff]
  %v171 = vld [vmem:[%s2 + $0x1e8] sm:$0xff]
  %v172 = vld [vmem:[%s2 + $0x1f0] sm:$0xff]
  %v173 = vld [vmem:[%s2 + $0x1f8] sm:$0xff]
  %174 = vmatprep.subr.mxu0 %v111
  %175 = vmatpush1.msra.mxu0 %v110
  %176 = vmatprep.subr.mxu0 %v115
  %177 = vmatpush1.msra.mxu0 %v114
  %178 = vmatprep.subr.mxu0 %v119
  %179 = vmatpush1.msra.mxu0 %v118
  %180 = vmatprep.subr.mxu0 %v123
  %181 = vmatpush1.msra.mxu0 %v122
  %182 = vmatprep.subr.mxu0 %v127
  %183 = vmatpush1.msra.mxu0 %v126
  %184 = vmatprep.subr.mxu0 %v131
  %185 = vmatpush1.msra.mxu0 %v130
  %186 = vmatprep.subr.mxu0 %v135
  %187 = vmatpush1.msra.mxu0 %v134
  %188 = vmatprep.subr.mxu0 %v139
  %189 = vmatpush1.msra.mxu0 %v138
  %190 = vmatprep.subr.mxu0 %v143
  %191 = vmatpush1.msra.mxu0 %v142
  %192 = vmatprep.subr.mxu0 %v147
  %193 = vmatpush1.msra.mxu0 %v146
  %194 = vmatprep.subr.mxu0 %v151
  %195 = vmatpush1.msra.mxu0 %v150
  %196 = vmatprep.subr.mxu0 %v155
  %197 = vmatpush1.msra.mxu0 %v154
  %198 = vmatprep.subr.mxu0 %v159
  %199 = vmatpush1.msra.mxu0 %v158
  %200 = vmatprep.subr.mxu0 %v163
  %201 = vmatpush1.msra.mxu0 %v162
  %202 = vmatprep.subr.mxu0 %v167
  %203 = vmatpush1.msra.mxu0 %v166
  %204 = vmatprep.subr.mxu0 %v171
  %205 = vmatpush1.msra.mxu0 %v170
  %206 = vmatprep.subr.mxu0 0.0
  %207 = vmatpush1.msra.mxu0 0.0
  %208 = vmatprep.subr.mxu0 0.0
  %209 = vmatpush1.msra.mxu0 0.0
  %210 = vmatprep.subr.mxu0 0.0
  %211 = vmatpush1.msra.mxu0 0.0
  %212 = vmatprep.subr.mxu0 0.0
  %213 = vmatpush1.msra.mxu0 0.0
  %214 = vmatprep.subr.mxu0 0.0
  %215 = vmatpush1.msra.mxu0 0.0
  %216 = vmatprep.subr.mxu0 0.0
  %217 = vmatpush1.msra.mxu0 0.0
  %218 = vmatprep.subr.mxu0 0.0
  %219 = vmatpush1.msra.mxu0 0.0
  %220 = vmatprep.subr.mxu0 0.0
  %221 = vmatpush1.msra.mxu0 0.0
  %222 = vmatprep.subr.mxu0 0.0
  %223 = vmatpush1.msra.mxu0 0.0
  %224 = vmatprep.subr.mxu0 0.0
  %225 = vmatpush1.msra.mxu0 0.0
  %226 = vmatprep.subr.mxu0 0.0
  %227 = vmatpush1.msra.mxu0 0.0
  %228 = vmatprep.subr.mxu0 0.0
  %229 = vmatpush1.msra.mxu0 0.0
  %230 = vmatprep.subr.mxu0 0.0
  %231 = vmatpush1.msra.mxu0 0.0
  %232 = vmatprep.subr.mxu0 0.0
  %233 = vmatpush1.msra.mxu0 0.0
  %234 = vmatprep.subr.mxu0 0.0
  %235 = vmatpush1.msra.mxu0 0.0
  %236 = vmatprep.subr.mxu0 0.0
  %237 = vmatpush1.msra.mxu0 0.0
  %238 = vmatprep.mubr.f32.mxu0 0.0
  %239 = vmatmul.mubr.f32.gmra.mrb[0].mxu0 0.0
  %v240 = vpop.f32.mrb[0].mxu0
  %v241 = vadd.f32 0.0, %v240
  %v242 = vpop.f32.mrb[0].mxu0
  %v243 = vadd.f32 0.0, %v242
  %244 = vdwg.mxu0
  %245 = vmatprep.subr.mxu0 %v113
  %246 = vmatpush1.msra.mxu0 %v112
  %247 = vmatprep.subr.mxu0 %v117
  %248 = vmatpush1.msra.mxu0 %v116
  %249 = vmatprep.subr.mxu0 %v121
  %250 = vmatpush1.msra.mxu0 %v120
  %251 = vmatprep.subr.mxu0 %v125
  %252 = vmatpush1.msra.mxu0 %v124
  %253 = vmatprep.subr.mxu0 %v129
  %254 = vmatpush1.msra.mxu0 %v128
  %255 = vmatprep.subr.mxu0 %v133
  %256 = vmatpush1.msra.mxu0 %v132
  %257 = vmatprep.subr.mxu0 %v137
  %258 = vmatpush1.msra.mxu0 %v136
  %259 = vmatprep.subr.mxu0 %v141
  %260 = vmatpush1.msra.mxu0 %v140
  %261 = vmatprep.subr.mxu0 %v145
  %262 = vmatpush1.msra.mxu0 %v144
  %263 = vmatprep.subr.mxu0 %v149
  %264 = vmatpush1.msra.mxu0 %v148
  %265 = vmatprep.subr.mxu0 %v153
  %266 = vmatpush1.msra.mxu0 %v152
  %267 = vmatprep.subr.mxu0 %v157
  %268 = vmatpush1.msra.mxu0 %v156
  %269 = vmatprep.subr.mxu0 %v161
  %270 = vmatpush1.msra.mxu0 %v160
  %271 = vmatprep.subr.mxu0 %v165
  %272 = vmatpush1.msra.mxu0 %v164
  %273 = vmatprep.subr.mxu0 %v169
  %274 = vmatpush1.msra.mxu0 %v168
  %275 = vmatprep.subr.mxu0 %v173
  %276 = vmatpush1.msra.mxu0 %v172
  %277 = vmatprep.subr.mxu0 0.0
  %278 = vmatpush1.msra.mxu0 0.0
  %279 = vmatprep.subr.mxu0 0.0
  %280 = vmatpush1.msra.mxu0 0.0
  %281 = vmatprep.subr.mxu0 0.0
  %282 = vmatpush1.msra.mxu0 0.0
  %283 = vmatprep.subr.mxu0 0.0
  %284 = vmatpush1.msra.mxu0 0.0
  %285 = vmatprep.subr.mxu0 0.0
  %286 = vmatpush1.msra.mxu0 0.0
  %287 = vmatprep.subr.mxu0 0.0
  %288 = vmatpush1.msra.mxu0 0.0
  %289 = vmatprep.subr.mxu0 0.0
  %290 = vmatpush1.msra.mxu0 0.0
  %291 = vmatprep.subr.mxu0 0.0
  %292 = vmatpush1.msra.mxu0 0.0
  %293 = vmatprep.subr.mxu0 0.0
  %294 = vmatpush1.msra.mxu0 0.0
  %295 = vmatprep.subr.mxu0 0.0
  %296 = vmatpush1.msra.mxu0 0.0
  %297 = vmatprep.subr.mxu0 0.0
  %298 = vmatpush1.msra.mxu0 0.0
  %299 = vmatprep.subr.mxu0 0.0
  %300 = vmatpush1.msra.mxu0 0.0
  %301 = vmatprep.subr.mxu0 0.0
  %302 = vmatpush1.msra.mxu0 0.0
  %303 = vmatprep.subr.mxu0 0.0
  %304 = vmatpush1.msra.mxu0 0.0
  %305 = vmatprep.subr.mxu0 0.0
  %306 = vmatpush1.msra.mxu0 0.0
  %307 = vmatprep.subr.mxu0 0.0
  %308 = vmatpush1.msra.mxu0 0.0
  %309 = vmatprep.mubr.f32.mxu0 0.0
  %310 = vmatmul.mubr.f32.gmra.mrb[0].mxu0 0.0
  %v311 = vpop.f32.mrb[0].mxu0
  %v312 = vadd.f32 0.0, %v311
  %v313 = vpop.f32.mrb[0].mxu0
  %v314 = vadd.f32 0.0, %v313
  %315 = vdwg.mxu0
  %v316 = vadd.f32 %v106, %v241
  %v317 = vadd.f32 %v107, %v243
  %v318 = vadd.f32 %v108, %v312
  %v319 = vadd.f32 %v109, %v314
  %v320 = vmul.f32 %v316, 0.5
  %v321 = vmul.f32 %v317, 0.5
  %v322 = vmul.f32 %v318, 0.5
  %v323 = vtanh.pop %v320
  %v324 = vtanh.pop %v321
  %v325 = vtanh.pop %v322
  %v326 = vadd.f32 %v323, 1.0
  %v327 = vadd.f32 %v324, 1.0
  %v328 = vadd.f32 %v325, 1.0
  %v329 = vmul.f32 %v326, 0.5
  %v330 = vmul.f32 %v327, 0.5
  %v331 = vmul.f32 %v328, 0.5
  %v332 = vtanh.pop %v319
  %v333 = vmul.f32 %v330, 0.0
  %v334 = vmul.f32 %v329, %v332
  %v335 = vadd.f32 %v333, %v334
  %v336 = vtanh.pop %v335
  %v337 = vmul.f32 %v331, %v336
  %s338 = scalar_lea.vmem %s0, 2
  %v339 = vld [vmem:[%s338] sm:$0x3]
  %341 = vset.pattern.permute.xlu0 0
  %342 = vperm.xlu0 %341, %v339
  %v343 = vpop.permute.xlu0 %342
  %v345 = vmul.f32 %v343, %v31
  %v346 = vmul.f32 %v343, %v35
  %v347 = vmul.f32 %v343, %v39
  %v348 = vmul.f32 %v343, %v43
  %349 = vset.pattern.permute.xlu0 1
  %350 = vperm.xlu0 %349, %v339
  %v351 = vpop.permute.xlu0 %350
  %v353 = vmul.f32 %v351, %v60
  %v354 = vmul.f32 %v351, %v64
  %v355 = vmul.f32 %v351, %v68
  %v356 = vmul.f32 %v351, %v72
  %v357 = vadd.f32 %v345, %v353
  %v358 = vadd.f32 %v346, %v354
  %v359 = vadd.f32 %v347, %v355
  %v360 = vadd.f32 %v348, %v356
  %v361 = vadd.f32 %v357, %v89
  %v362 = vadd.f32 %v358, %v93
  %v363 = vadd.f32 %v359, %v97
  %v364 = vadd.f32 %v360, %v101
  %365 = vmatprep.subr.mxu0 %v111
  %366 = vmatpush1.msra.mxu0 %v110
  %367 = vmatprep.subr.mxu0 %v115
  %368 = vmatpush1.msra.mxu0 %v114
  %369 = vmatprep.subr.mxu0 %v119
  %370 = vmatpush1.msra.mxu0 %v118
  %371 = vmatprep.subr.mxu0 %v123
  %372 = vmatpush1.msra.mxu0 %v122
  %373 = vmatprep.subr.mxu0 %v127
  %374 = vmatpush1.msra.mxu0 %v126
  %375 = vmatprep.subr.mxu0 %v131
  %376 = vmatpush1.msra.mxu0 %v130
  %377 = vmatprep.subr.mxu0 %v135
  %378 = vmatpush1.msra.mxu0 %v134
  %379 = vmatprep.subr.mxu0 %v139
  %380 = vmatpush1.msra.mxu0 %v138
  %381 = vmatprep.subr.mxu0 %v143
  %382 = vmatpush1.msra.mxu0 %v142
  %383 = vmatprep.subr.mxu0 %v147
  %384 = vmatpush1.msra.mxu0 %v146
  %385 = vmatprep.subr.mxu0 %v151
  %386 = vmatpush1.msra.mxu0 %v150
  %387 = vmatprep.subr.mxu0 %v155
  %388 = vmatpush1.msra.mxu0 %v154
  %389 = vmatprep.subr.mxu0 %v159
  %390 = vmatpush1.msra.mxu0 %v158
  %391 = vmatprep.subr.mxu0 %v163
  %392 = vmatpush1.msra.mxu0 %v162
  %393 = vmatprep.subr.mxu0 %v167
  %394 = vmatpush1.msra.mxu0 %v166
  %395 = vmatprep.subr.mxu0 %v171
  %396 = vmatpush1.msra.mxu0 %v170
  %397 = vmatprep.subr.mxu0 0.0
  %398 = vmatpush1.msra.mxu0 0.0
  %399 = vmatprep.subr.mxu0 0.0
  %400 = vmatpush1.msra.mxu0 0.0
  %401 = vmatprep.subr.mxu0 0.0
  %402 = vmatpush1.msra.mxu0 0.0
  %403 = vmatprep.subr.mxu0 0.0
  %404 = vmatpush1.msra.mxu0 0.0
  %405 = vmatprep.subr.mxu0 0.0
  %406 = vmatpush1.msra.mxu0 0.0
  %407 = vmatprep.subr.mxu0 0.0
  %408 = vmatpush1.msra.mxu0 0.0
  %409 = vmatprep.subr.mxu0 0.0
  %410 = vmatpush1.msra.mxu0 0.0
  %411 = vmatprep.subr.mxu0 0.0
  %412 = vmatpush1.msra.mxu0 0.0
  %413 = vmatprep.subr.mxu0 0.0
  %414 = vmatpush1.msra.mxu0 0.0
  %415 = vmatprep.subr.mxu0 0.0
  %416 = vmatpush1.msra.mxu0 0.0
  %417 = vmatprep.subr.mxu0 0.0
  %418 = vmatpush1.msra.mxu0 0.0
  %419 = vmatprep.subr.mxu0 0.0
  %420 = vmatpush1.msra.mxu0 0.0
  %421 = vmatprep.subr.mxu0 0.0
  %422 = vmatpush1.msra.mxu0 0.0
  %423 = vmatprep.subr.mxu0 0.0
  %424 = vmatpush1.msra.mxu0 0.0
  %425 = vmatprep.subr.mxu0 0.0
  %426 = vmatpush1.msra.mxu0 0.0
  %427 = vmatprep.subr.mxu0 0.0
  %428 = vmatpush1.msra.mxu0 0.0
  %429 = vmatprep.mubr.f32.mxu0 0.0
  %430 = vmatmul.mubr.f32.gmra.mrb[0].mxu0 %v337
  %v431 = vpop.f32.mrb[0].mxu0
  %v432 = vadd.f32 0.0, %v431
  %v433 = vpop.f32.mrb[0].mxu0
  %v434 = vadd.f32 0.0, %v433
  %435 = vdwg.mxu0
  %436 = vmatprep.subr.mxu0 %v113
  %437 = vmatpush1.msra.mxu0 %v112
  %438 = vmatprep.subr.mxu0 %v117
  %439 = vmatpush1.msra.mxu0 %v116
  %440 = vmatprep.subr.mxu0 %v121
  %441 = vmatpush1.msra.mxu0 %v120
  %442 = vmatprep.subr.mxu0 %v125
  %443 = vmatpush1.msra.mxu0 %v124
  %444 = vmatprep.subr.mxu0 %v129
  %445 = vmatpush1.msra.mxu0 %v128
  %446 = vmatprep.subr.mxu0 %v133
  %447 = vmatpush1.msra.mxu0 %v132
  %448 = vmatprep.subr.mxu0 %v137
  %449 = vmatpush1.msra.mxu0 %v136
  %450 = vmatprep.subr.mxu0 %v141
  %451 = vmatpush1.msra.mxu0 %v140
  %452 = vmatprep.subr.mxu0 %v145
  %453 = vmatpush1.msra.mxu0 %v144
  %454 = vmatprep.subr.mxu0 %v149
  %455 = vmatpush1.msra.mxu0 %v148
  %456 = vmatprep.subr.mxu0 %v153
  %457 = vmatpush1.msra.mxu0 %v152
  %458 = vmatprep.subr.mxu0 %v157
  %459 = vmatpush1.msra.mxu0 %v156
  %460 = vmatprep.subr.mxu0 %v161
  %461 = vmatpush1.msra.mxu0 %v160
  %462 = vmatprep.subr.mxu0 %v165
  %463 = vmatpush1.msra.mxu0 %v164
  %464 = vmatprep.subr.mxu0 %v169
  %465 = vmatpush1.msra.mxu0 %v168
  %466 = vmatprep.subr.mxu0 %v173
  %467 = vmatpush1.msra.mxu0 %v172
  %468 = vmatprep.subr.mxu0 0.0
  %469 = vmatpush1.msra.mxu0 0.0
  %470 = vmatprep.subr.mxu0 0.0
  %471 = vmatpush1.msra.mxu0 0.0
  %472 = vmatprep.subr.mxu0 0.0
  %473 = vmatpush1.msra.mxu0 0.0
  %474 = vmatprep.subr.mxu0 0.0
  %475 = vmatpush1.msra.mxu0 0.0
  %476 = vmatprep.subr.mxu0 0.0
  %477 = vmatpush1.msra.mxu0 0.0
  %478 = vmatprep.subr.mxu0 0.0
  %479 = vmatpush1.msra.mxu0 0.0
  %480 = vmatprep.subr.mxu0 0.0
  %481 = vmatpush1.msra.mxu0 0.0
  %482 = vmatprep.subr.mxu0 0.0
  %483 = vmatpush1.msra.mxu0 0.0
  %484 = vmatprep.subr.mxu0 0.0
  %485 = vmatpush1.msra.mxu0 0.0
  %486 = vmatprep.subr.mxu0 0.0
  %487 = vmatpush1.msra.mxu0 0.0
  %488 = vmatprep.subr.mxu0 0.0
  %489 = vmatpush1.msra.mxu0 0.0
  %490 = vmatprep.subr.mxu0 0.0
  %491 = vmatpush1.msra.mxu0 0.0
  %492 = vmatprep.subr.mxu0 0.0
  %493 = vmatpush1.msra.mxu0 0.0
  %494 = vmatprep.subr.mxu0 0.0
  %495 = vmatpush1.msra.mxu0 0.0
  %496 = vmatprep.subr.mxu0 0.0
  %497 = vmatpush1.msra.mxu0 0.0
  %498 = vmatprep.subr.mxu0 0.0
  %499 = vmatpush1.msra.mxu0 0.0
  %500 = vmatprep.mubr.f32.mxu0 0.0
  %501 = vmatmul.mubr.f32.gmra.mrb[0].mxu0 %v337
  %v502 = vpop.f32.mrb[0].mxu0
  %v503 = vadd.f32 0.0, %v502
  %v504 = vpop.f32.mrb[0].mxu0
  %v505 = vadd.f32 0.0, %v504
  %506 = vdwg.mxu0
  %v507 = vadd.f32 %v361, %v432
  %v508 = vadd.f32 %v362, %v434
  %v509 = vadd.f32 %v363, %v503
  %v510 = vadd.f32 %v364, %v505
  %v511 = vmul.f32 %v507, 0.5
  %v512 = vmul.f32 %v508, 0.5
  %v513 = vmul.f32 %v509, 0.5
  %v514 = vtanh.pop %v511
  %v515 = vtanh.pop %v512
  %v516 = vtanh.pop %v513
  %v517 = vadd.f32 %v514, 1.0
  %v518 = vadd.f32 %v515, 1.0
  %v519 = vadd.f32 %v516, 1.0
  %v520 = vmul.f32 %v517, 0.5
  %v521 = vmul.f32 %v518, 0.5
  %v522 = vmul.f32 %v519, 0.5
  %v523 = vtanh.pop %v510
  %v524 = vmul.f32 %v521, %v335
  %v525 = vmul.f32 %v520, %v523
  %v526 = vadd.f32 %v524, %v525
  %v527 = vtanh.pop %v526
  %v528 = vmul.f32 %v522, %v527
  %s529 = scalar_lea.vmem %s0, 4
  %v530 = vld [vmem:[%s529] sm:$0x3]
  %532 = vset.pattern.permute.xlu0 0
  %533 = vperm.xlu0 %532, %v530
  %v534 = vpop.permute.xlu0 %533
  %v536 = vmul.f32 %v534, %v31
  %v537 = vmul.f32 %v534, %v35
  %v538 = vmul.f32 %v534, %v39
  %v539 = vmul.f32 %v534, %v43
  %540 = vset.pattern.permute.xlu0 1
  %541 = vperm.xlu0 %540, %v530
  %v542 = vpop.permute.xlu0 %541
  %v544 = vmul.f32 %v542, %v60
  %v545 = vmul.f32 %v542, %v64
  %v546 = vmul.f32 %v542, %v68
  %v547 = vmul.f32 %v542, %v72
  %v548 = vadd.f32 %v536, %v544
  %v549 = vadd.f32 %v537, %v545
  %v550 = vadd.f32 %v538, %v546
  %v551 = vadd.f32 %v539, %v547
  %v552 = vadd.f32 %v548, %v89
  %v553 = vadd.f32 %v549, %v93
  %v554 = vadd.f32 %v550, %v97
  %v555 = vadd.f32 %v551, %v101
  %556 = vmatprep.subr.mxu0 %v111
  %557 = vmatpush1.msra.mxu0 %v110
  %558 = vmatprep.subr.mxu0 %v115
  %559 = vmatpush1.msra.mxu0 %v114
  %560 = vmatprep.subr.mxu0 %v119
  %561 = vmatpush1.msra.mxu0 %v118
  %562 = vmatprep.subr.mxu0 %v123
  %563 = vmatpush1.msra.mxu0 %v122
  %564 = vmatprep.subr.mxu0 %v127
  %565 = vmatpush1.msra.mxu0 %v126
  %566 = vmatprep.subr.mxu0 %v131
  %567 = vmatpush1.msra.mxu0 %v130
  %568 = vmatprep.subr.mxu0 %v135
  %569 = vmatpush1.msra.mxu0 %v134
  %570 = vmatprep.subr.mxu0 %v139
  %571 = vmatpush1.msra.mxu0 %v138
  %572 = vmatprep.subr.mxu0 %v143
  %573 = vmatpush1.msra.mxu0 %v142
  %574 = vmatprep.subr.mxu0 %v147
  %575 = vmatpush1.msra.mxu0 %v146
  %576 = vmatprep.subr.mxu0 %v151
  %577 = vmatpush1.msra.mxu0 %v150
  %578 = vmatprep.subr.mxu0 %v155
  %579 = vmatpush1.msra.mxu0 %v154
  %580 = vmatprep.subr.mxu0 %v159
  %581 = vmatpush1.msra.mxu0 %v158
  %582 = vmatprep.subr.mxu0 %v163
  %583 = vmatpush1.msra.mxu0 %v162
  %584 = vmatprep.subr.mxu0 %v167
  %585 = vmatpush1.msra.mxu0 %v166
  %586 = vmatprep.subr.mxu0 %v171
  %587 = vmatpush1.msra.mxu0 %v170
  %588 = vmatprep.subr.mxu0 0.0
  %589 = vmatpush1.msra.mxu0 0.0
  %590 = vmatprep.subr.mxu0 0.0
  %591 = vmatpush1.msra.mxu0 0.0
  %592 = vmatprep.subr.mxu0 0.0
  %593 = vmatpush1.msra.mxu0 0.0
  %594 = vmatprep.subr.mxu0 0.0
  %595 = vmatpush1.msra.mxu0 0.0
  %596 = vmatprep.subr.mxu0 0.0
  %597 = vmatpush1.msra.mxu0 0.0
  %598 = vmatprep.subr.mxu0 0.0
  %599 = vmatpush1.msra.mxu0 0.0
  %600 = vmatprep.subr.mxu0 0.0
  %601 = vmatpush1.msra.mxu0 0.0
  %602 = vmatprep.subr.mxu0 0.0
  %603 = vmatpush1.msra.mxu0 0.0
  %604 = vmatprep.subr.mxu0 0.0
  %605 = vmatpush1.msra.mxu0 0.0
  %606 = vmatprep.subr.mxu0 0.0
  %607 = vmatpush1.msra.mxu0 0.0
  %608 = vmatprep.subr.mxu0 0.0
  %609 = vmatpush1.msra.mxu0 0.0
  %610 = vmatprep.subr.mxu0 0.0
  %611 = vmatpush1.msra.mxu0 0.0
  %612 = vmatprep.subr.mxu0 0.0
  %613 = vmatpush1.msra.mxu0 0.0
  %614 = vmatprep.subr.mxu0 0.0
  %615 = vmatpush1.msra.mxu0 0.0
  %616 = vmatprep.subr.mxu0 0.0
  %617 = vmatpush1.msra.mxu0 0.0
  %618 = vmatprep.subr.mxu0 0.0
  %619 = vmatpush1.msra.mxu0 0.0
  %620 = vmatprep.mubr.f32.mxu0 0.0
  %621 = vmatmul.mubr.f32.gmra.mrb[0].mxu0 %v528
  %v622 = vpop.f32.mrb[0].mxu0
  %v623 = vadd.f32 0.0, %v622
  %v624 = vpop.f32.mrb[0].mxu0
  %v625 = vadd.f32 0.0, %v624
  %626 = vdwg.mxu0
  %627 = vmatprep.subr.mxu0 %v113
  %628 = vmatpush1.msra.mxu0 %v112
  %629 = vmatprep.subr.mxu0 %v117
  %630 = vmatpush1.msra.mxu0 %v116
  %631 = vmatprep.subr.mxu0 %v121
  %632 = vmatpush1.msra.mxu0 %v120
  %633 = vmatprep.subr.mxu0 %v125
  %634 = vmatpush1.msra.mxu0 %v124
  %635 = vmatprep.subr.mxu0 %v129
  %636 = vmatpush1.msra.mxu0 %v128
  %637 = vmatprep.subr.mxu0 %v133
  %638 = vmatpush1.msra.mxu0 %v132
  %639 = vmatprep.subr.mxu0 %v137
  %640 = vmatpush1.msra.mxu0 %v136
  %641 = vmatprep.subr.mxu0 %v141
  %642 = vmatpush1.msra.mxu0 %v140
  %643 = vmatprep.subr.mxu0 %v145
  %644 = vmatpush1.msra.mxu0 %v144
  %645 = vmatprep.subr.mxu0 %v149
  %646 = vmatpush1.msra.mxu0 %v148
  %647 = vmatprep.subr.mxu0 %v153
  %648 = vmatpush1.msra.mxu0 %v152
  %649 = vmatprep.subr.mxu0 %v157
  %650 = vmatpush1.msra.mxu0 %v156
  %651 = vmatprep.subr.mxu0 %v161
  %652 = vmatpush1.msra.mxu0 %v160
  %653 = vmatprep.subr.mxu0 %v165
  %654 = vmatpush1.msra.mxu0 %v164
  %655 = vmatprep.subr.mxu0 %v169
  %656 = vmatpush1.msra.mxu0 %v168
  %657 = vmatprep.subr.mxu0 %v173
  %658 = vmatpush1.msra.mxu0 %v172
  %659 = vmatprep.subr.mxu0 0.0
  %660 = vmatpush1.msra.mxu0 0.0
  %661 = vmatprep.subr.mxu0 0.0
  %662 = vmatpush1.msra.mxu0 0.0
  %663 = vmatprep.subr.mxu0 0.0
  %664 = vmatpush1.msra.mxu0 0.0
  %665 = vmatprep.subr.mxu0 0.0
  %666 = vmatpush1.msra.mxu0 0.0
  %667 = vmatprep.subr.mxu0 0.0
  %668 = vmatpush1.msra.mxu0 0.0
  %669 = vmatprep.subr.mxu0 0.0
  %670 = vmatpush1.msra.mxu0 0.0
  %671 = vmatprep.subr.mxu0 0.0
  %672 = vmatpush1.msra.mxu0 0.0
  %673 = vmatprep.subr.mxu0 0.0
  %674 = vmatpush1.msra.mxu0 0.0
  %675 = vmatprep.subr.mxu0 0.0
  %676 = vmatpush1.msra.mxu0 0.0
  %677 = vmatprep.subr.mxu0 0.0
  %678 = vmatpush1.msra.mxu0 0.0
  %679 = vmatprep.subr.mxu0 0.0
  %680 = vmatpush1.msra.mxu0 0.0
  %681 = vmatprep.subr.mxu0 0.0
  %682 = vmatpush1.msra.mxu0 0.0
  %683 = vmatprep.subr.mxu0 0.0
  %684 = vmatpush1.msra.mxu0 0.0
  %685 = vmatprep.subr.mxu0 0.0
  %686 = vmatpush1.msra.mxu0 0.0
  %687 = vmatprep.subr.mxu0 0.0
  %688 = vmatpush1.msra.mxu0 0.0
  %689 = vmatprep.subr.mxu0 0.0
  %690 = vmatpush1.msra.mxu0 0.0
  %691 = vmatprep.mubr.f32.mxu0 0.0
  %692 = vmatmul.mubr.f32.gmra.mrb[0].mxu0 %v528
  %v693 = vpop.f32.mrb[0].mxu0
  %v694 = vadd.f32 0.0, %v693
  %v695 = vpop.f32.mrb[0].mxu0
  %v696 = vadd.f32 0.0, %v695
  %697 = vdwg.mxu0
  %v698 = vadd.f32 %v552, %v623
  %v699 = vadd.f32 %v553, %v625
  %v700 = vadd.f32 %v554, %v694
  %v701 = vadd.f32 %v555, %v696
  %v702 = vmul.f32 %v698, 0.5
  %v703 = vmul.f32 %v699, 0.5
  %v704 = vmul.f32 %v700, 0.5
  %v705 = vtanh.pop %v702
  %v706 = vtanh.pop %v703
  %v707 = vtanh.pop %v704
  %v708 = vadd.f32 %v705, 1.0
  %v709 = vadd.f32 %v706, 1.0
  %v710 = vadd.f32 %v707, 1.0
  %v711 = vmul.f32 %v708, 0.5
  %v712 = vmul.f32 %v709, 0.5
  %v713 = vmul.f32 %v710, 0.5
  %v714 = vtanh.pop %v701
  %v715 = vmul.f32 %v712, %v526
  %v716 = vmul.f32 %v711, %v714
  %v717 = vadd.f32 %v715, %v716
  %v718 = vtanh.pop %v717
  %v719 = vmul.f32 %v713, %v718
  %s720 = scalar_lea.vmem %s0, 6
  %v721 = vld [vmem:[%s720] sm:$0x3]
  %723 = vset.pattern.permute.xlu0 0
  %724 = vperm.xlu0 %723, %v721
  %v725 = vpop.permute.xlu0 %724
  %v727 = vmul.f32 %v725, %v31
  %v728 = vmul.f32 %v725, %v35
  %v729 = vmul.f32 %v725, %v39
  %v730 = vmul.f32 %v725, %v43
  %731 = vset.pattern.permute.xlu0 1
  %732 = vperm.xlu0 %731, %v721
  %v733 = vpop.permute.xlu0 %732
  %v735 = vmul.f32 %v733, %v60
  %v736 = vmul.f32 %v733, %v64
  %v737 = vmul.f32 %v733, %v68
  %v738 = vmul.f32 %v733, %v72
  %v739 = vadd.f32 %v727, %v735
  %v740 = vadd.f32 %v728, %v736
  %v741 = vadd.f32 %v729, %v737
  %v742 = vadd.f32 %v730, %v738
  %v743 = vadd.f32 %v739, %v89
  %v744 = vadd.f32 %v740, %v93
  %v745 = vadd.f32 %v741, %v97
  %v746 = vadd.f32 %v742, %v101
  %747 = vmatprep.subr.mxu0 %v111
  %748 = vmatpush1.msra.mxu0 %v110
  %749 = vmatprep.subr.mxu0 %v115
  %750 = vmatpush1.msra.mxu0 %v114
  %751 = vmatprep.subr.mxu0 %v119
  %752 = vmatpush1.msra.mxu0 %v118
  %753 = vmatprep.subr.mxu0 %v123
  %754 = vmatpush1.msra.mxu0 %v122
  %755 = vmatprep.subr.mxu0 %v127
  %756 = vmatpush1.msra.mxu0 %v126
  %757 = vmatprep.subr.mxu0 %v131
  %758 = vmatpush1.msra.mxu0 %v130
  %759 = vmatprep.subr.mxu0 %v135
  %760 = vmatpush1.msra.mxu0 %v134
  %761 = vmatprep.subr.mxu0 %v139
  %762 = vmatpush1.msra.mxu0 %v138
  %763 = vmatprep.subr.mxu0 %v143
  %764 = vmatpush1.msra.mxu0 %v142
  %765 = vmatprep.subr.mxu0 %v147
  %766 = vmatpush1.msra.mxu0 %v146
  %767 = vmatprep.subr.mxu0 %v151
  %768 = vmatpush1.msra.mxu0 %v150
  %769 = vmatprep.subr.mxu0 %v155
  %770 = vmatpush1.msra.mxu0 %v154
  %771 = vmatprep.subr.mxu0 %v159
  %772 = vmatpush1.msra.mxu0 %v158
  %773 = vmatprep.subr.mxu0 %v163
  %774 = vmatpush1.msra.mxu0 %v162
  %775 = vmatprep.subr.mxu0 %v167
  %776 = vmatpush1.msra.mxu0 %v166
  %777 = vmatprep.subr.mxu0 %v171
  %778 = vmatpush1.msra.mxu0 %v170
  %779 = vmatprep.subr.mxu0 0.0
  %780 = vmatpush1.msra.mxu0 0.0
  %781 = vmatprep.subr.mxu0 0.0
  %782 = vmatpush1.msra.mxu0 0.0
  %783 = vmatprep.subr.mxu0 0.0
  %784 = vmatpush1.msra.mxu0 0.0
  %785 = vmatprep.subr.mxu0 0.0
  %786 = vmatpush1.msra.mxu0 0.0
  %787 = vmatprep.subr.mxu0 0.0
  %788 = vmatpush1.msra.mxu0 0.0
  %789 = vmatprep.subr.mxu0 0.0
  %790 = vmatpush1.msra.mxu0 0.0
  %791 = vmatprep.subr.mxu0 0.0
  %792 = vmatpush1.msra.mxu0 0.0
  %793 = vmatprep.subr.mxu0 0.0
  %794 = vmatpush1.msra.mxu0 0.0
  %795 = vmatprep.subr.mxu0 0.0
  %796 = vmatpush1.msra.mxu0 0.0
  %797 = vmatprep.subr.mxu0 0.0
  %798 = vmatpush1.msra.mxu0 0.0
  %799 = vmatprep.subr.mxu0 0.0
  %800 = vmatpush1.msra.mxu0 0.0
  %801 = vmatprep.subr.mxu0 0.0
  %802 = vmatpush1.msra.mxu0 0.0
  %803 = vmatprep.subr.mxu0 0.0
  %804 = vmatpush1.msra.mxu0 0.0
  %805 = vmatprep.subr.mxu0 0.0
  %806 = vmatpush1.msra.mxu0 0.0
  %807 = vmatprep.subr.mxu0 0.0
  %808 = vmatpush1.msra.mxu0 0.0
  %809 = vmatprep.subr.mxu0 0.0
  %810 = vmatpush1.msra.mxu0 0.0
  %811 = vmatprep.mubr.f32.mxu0 0.0
  %812 = vmatmul.mubr.f32.gmra.mrb[0].mxu0 %v719
  %v813 = vpop.f32.mrb[0].mxu0
  %v814 = vadd.f32 0.0, %v813
  %v815 = vpop.f32.mrb[0].mxu0
  %v816 = vadd.f32 0.0, %v815
  %817 = vdwg.mxu0
  %818 = vmatprep.subr.mxu0 %v113
  %819 = vmatpush1.msra.mxu0 %v112
  %820 = vmatprep.subr.mxu0 %v117
  %821 = vmatpush1.msra.mxu0 %v116
  %822 = vmatprep.subr.mxu0 %v121
  %823 = vmatpush1.msra.mxu0 %v120
  %824 = vmatprep.subr.mxu0 %v125
  %825 = vmatpush1.msra.mxu0 %v124
  %826 = vmatprep.subr.mxu0 %v129
  %827 = vmatpush1.msra.mxu0 %v128
  %828 = vmatprep.subr.mxu0 %v133
  %829 = vmatpush1.msra.mxu0 %v132
  %830 = vmatprep.subr.mxu0 %v137
  %831 = vmatpush1.msra.mxu0 %v136
  %832 = vmatprep.subr.mxu0 %v141
  %833 = vmatpush1.msra.mxu0 %v140
  %834 = vmatprep.subr.mxu0 %v145
  %835 = vmatpush1.msra.mxu0 %v144
  %836 = vmatprep.subr.mxu0 %v149
  %837 = vmatpush1.msra.mxu0 %v148
  %838 = vmatprep.subr.mxu0 %v153
  %839 = vmatpush1.msra.mxu0 %v152
  %840 = vmatprep.subr.mxu0 %v157
  %841 = vmatpush1.msra.mxu0 %v156
  %842 = vmatprep.subr.mxu0 %v161
  %843 = vmatpush1.msra.mxu0 %v160
  %844 = vmatprep.subr.mxu0 %v165
  %845 = vmatpush1.msra.mxu0 %v164
  %846 = vmatprep.subr.mxu0 %v169
  %847 = vmatpush1.msra.mxu0 %v168
  %848 = vmatprep.subr.mxu0 %v173
  %849 = vmatpush1.msra.mxu0 %v172
  %850 = vmatprep.subr.mxu0 0.0
  %851 = vmatpush1.msra.mxu0 0.0
  %852 = vmatprep.subr.mxu0 0.0
  %853 = vmatpush1.msra.mxu0 0.0
  %854 = vmatprep.subr.mxu0 0.0
  %855 = vmatpush1.msra.mxu0 0.0
  %856 = vmatprep.subr.mxu0 0.0
  %857 = vmatpush1.msra.mxu0 0.0
  %858 = vmatprep.subr.mxu0 0.0
  %859 = vmatpush1.msra.mxu0 0.0
  %860 = vmatprep.subr.mxu0 0.0
  %861 = vmatpush1.msra.mxu0 0.0
  %862 = vmatprep.subr.mxu0 0.0
  %863 = vmatpush1.msra.mxu0 0.0
  %864 = vmatprep.subr.mxu0 0.0
  %865 = vmatpush1.msra.mxu0 0.0
  %866 = vmatprep.subr.mxu0 0.0
  %867 = vmatpush1.msra.mxu0 0.0
  %868 = vmatprep.subr.mxu0 0.0
  %869 = vmatpush1.msra.mxu0 0.0
  %870 = vmatprep.subr.mxu0 0.0
  %871 = vmatpush1.msra.mxu0 0.0
  %872 = vmatprep.subr.mxu0 0.0
  %873 = vmatpush1.msra.mxu0 0.0
  %874 = vmatprep.subr.mxu0 0.0
  %875 = vmatpush1.msra.mxu0 0.0
  %876 = vmatprep.subr.mxu0 0.0
  %877 = vmatpush1.msra.mxu0 0.0
  %878 = vmatprep.subr.mxu0 0.0
  %879 = vmatpush1.msra.mxu0 0.0
  %880 = vmatprep.subr.mxu0 0.0
  %881 = vmatpush1.msra.mxu0 0.0
  %882 = vmatprep.mubr.f32.mxu0 0.0
  %883 = vmatmul.mubr.f32.gmra.mrb[0].mxu0 %v719
  %v884 = vpop.f32.mrb[0].mxu0
  %v885 = vadd.f32 0.0, %v884
  %v886 = vpop.f32.mrb[0].mxu0
  %v887 = vadd.f32 0.0, %v886
  %888 = vdwg.mxu0
  %v889 = vadd.f32 %v743, %v814
  %v890 = vadd.f32 %v744, %v816
  %v891 = vadd.f32 %v745, %v885
  %v892 = vadd.f32 %v746, %v887
  %v893 = vmul.f32 %v889, 0.5
  %v894 = vmul.f32 %v890, 0.5
  %v895 = vmul.f32 %v891, 0.5
  %v896 = vtanh.pop %v893
  %v897 = vtanh.pop %v894
  %v898 = vtanh.pop %v895
  %v899 = vadd.f32 %v896, 1.0
  %v900 = vadd.f32 %v897, 1.0
  %v901 = vadd.f32 %v898, 1.0
  %v902 = vmul.f32 %v899, 0.5
  %v903 = vmul.f32 %v900, 0.5
  %v904 = vmul.f32 %v901, 0.5
  %v905 = vtanh.pop %v892
  %v906 = vmul.f32 %v903, %v717
  %v907 = vmul.f32 %v902, %v905
  %v908 = vadd.f32 %v906, %v907
  %v909 = vtanh.pop %v908
  %v910 = vmul.f32 %v904, %v909
  %s911 = scalar_lea.vmem %s0, 8
  %v912 = vld [vmem:[%s911] sm:$0x3]
  %914 = vset.pattern.permute.xlu0 0
  %915 = vperm.xlu0 %914, %v912
  %v916 = vpop.permute.xlu0 %915
  %v918 = vmul.f32 %v916, %v31
  %v919 = vmul.f32 %v916, %v35
  %v920 = vmul.f32 %v916, %v39
  %v921 = vmul.f32 %v916, %v43
  %922 = vset.pattern.permute.xlu0 1
  %923 = vperm.xlu0 %922, %v912
  %v924 = vpop.permute.xlu0 %923
  %v926 = vmul.f32 %v924, %v60
  %v927 = vmul.f32 %v924, %v64
  %v928 = vmul.f32 %v924, %v68
  %v929 = vmul.f32 %v924, %v72
  %v930 = vadd.f32 %v918, %v926
  %v931 = vadd.f32 %v919, %v927
  %v932 = vadd.f32 %v920, %v928
  %v933 = vadd.f32 %v921, %v929
  %v934 = vadd.f32 %v930, %v89
  %v935 = vadd.f32 %v931, %v93
  %v936 = vadd.f32 %v932, %v97
  %v937 = vadd.f32 %v933, %v101
  %938 = vmatprep.subr.mxu0 %v111
  %939 = vmatpush1.msra.mxu0 %v110
  %940 = vmatprep.subr.mxu0 %v115
  %941 = vmatpush1.msra.mxu0 %v114
  %942 = vmatprep.subr.mxu0 %v119
  %943 = vmatpush1.msra.mxu0 %v118
  %944 = vmatprep.subr.mxu0 %v123
  %945 = vmatpush1.msra.mxu0 %v122
  %946 = vmatprep.subr.mxu0 %v127
  %947 = vmatpush1.msra.mxu0 %v126
  %948 = vmatprep.subr.mxu0 %v131
  %949 = vmatpush1.msra.mxu0 %v130
  %950 = vmatprep.subr.mxu0 %v135
  %951 = vmatpush1.msra.mxu0 %v134
  %952 = vmatprep.subr.mxu0 %v139
  %953 = vmatpush1.msra.mxu0 %v138
  %954 = vmatprep.subr.mxu0 %v143
  %955 = vmatpush1.msra.mxu0 %v142
  %956 = vmatprep.subr.mxu0 %v147
  %957 = vmatpush1.msra.mxu0 %v146
  %958 = vmatprep.subr.mxu0 %v151
  %959 = vmatpush1.msra.mxu0 %v150
  %960 = vmatprep.subr.mxu0 %v155
  %961 = vmatpush1.msra.mxu0 %v154
  %962 = vmatprep.subr.mxu0 %v159
  %963 = vmatpush1.msra.mxu0 %v158
  %964 = vmatprep.subr.mxu0 %v163
  %965 = vmatpush1.msra.mxu0 %v162
  %966 = vmatprep.subr.mxu0 %v167
  %967 = vmatpush1.msra.mxu0 %v166
  %968 = vmatprep.subr.mxu0 %v171
  %969 = vmatpush1.msra.mxu0 %v170
  %970 = vmatprep.subr.mxu0 0.0
  %971 = vmatpush1.msra.mxu0 0.0
  %972 = vmatprep.subr.mxu0 0.0
  %973 = vmatpush1.msra.mxu0 0.0
  %974 = vmatprep.subr.mxu0 0.0
  %975 = vmatpush1.msra.mxu0 0.0
  %976 = vmatprep.subr.mxu0 0.0
  %977 = vmatpush1.msra.mxu0 0.0
  %978 = vmatprep.subr.mxu0 0.0
  %979 = vmatpush1.msra.mxu0 0.0
  %980 = vmatprep.subr.mxu0 0.0
  %981 = vmatpush1.msra.mxu0 0.0
  %982 = vmatprep.subr.mxu0 0.0
  %983 = vmatpush1.msra.mxu0 0.0
  %984 = vmatprep.subr.mxu0 0.0
  %985 = vmatpush1.msra.mxu0 0.0
  %986 = vmatprep.subr.mxu0 0.0
  %987 = vmatpush1.msra.mxu0 0.0
  %988 = vmatprep.subr.mxu0 0.0
  %989 = vmatpush1.msra.mxu0 0.0
  %990 = vmatprep.subr.mxu0 0.0
  %991 = vmatpush1.msra.mxu0 0.0
  %992 = vmatprep.subr.mxu0 0.0
  %993 = vmatpush1.msra.mxu0 0.0
  %994 = vmatprep.subr.mxu0 0.0
  %995 = vmatpush1.msra.mxu0 0.0
  %996 = vmatprep.subr.mxu0 0.0
  %997 = vmatpush1.msra.mxu0 0.0
  %998 = vmatprep.subr.mxu0 0.0
  %999 = vmatpush1.msra.mxu0 0.0
  %1000 = vmatprep.subr.mxu0 0.0
  %1001 = vmatpush1.msra.mxu0 0.0
  %1002 = vmatprep.mubr.f32.mxu0 0.0
  %1003 = vmatmul.mubr.f32.gmra.mrb[0].mxu0 %v910
  %v1004 = vpop.f32.mrb[0].mxu0
  %v1005 = vadd.f32 0.0, %v1004
  %v1006 = vpop.f32.mrb[0].mxu0
  %v1007 = vadd.f32 0.0, %v1006
  %1008 = vdwg.mxu0
  %1009 = vmatprep.subr.mxu0 %v113
  %1010 = vmatpush1.msra.mxu0 %v112
  %1011 = vmatprep.subr.mxu0 %v117
  %1012 = vmatpush1.msra.mxu0 %v116
  %1013 = vmatprep.subr.mxu0 %v121
  %1014 = vmatpush1.msra.mxu0 %v120
  %1015 = vmatprep.subr.mxu0 %v125
  %1016 = vmatpush1.msra.mxu0 %v124
  %1017 = vmatprep.subr.mxu0 %v129
  %1018 = vmatpush1.msra.mxu0 %v128
  %1019 = vmatprep.subr.mxu0 %v133
  %1020 = vmatpush1.msra.mxu0 %v132
  %1021 = vmatprep.subr.mxu0 %v137
  %1022 = vmatpush1.msra.mxu0 %v136
  %1023 = vmatprep.subr.mxu0 %v141
  %1024 = vmatpush1.msra.mxu0 %v140
  %1025 = vmatprep.subr.mxu0 %v145
  %1026 = vmatpush1.msra.mxu0 %v144
  %1027 = vmatprep.subr.mxu0 %v149
  %1028 = vmatpush1.msra.mxu0 %v148
  %1029 = vmatprep.subr.mxu0 %v153
  %1030 = vmatpush1.msra.mxu0 %v152
  %1031 = vmatprep.subr.mxu0 %v157
  %1032 = vmatpush1.msra.mxu0 %v156
  %1033 = vmatprep.subr.mxu0 %v161
  %1034 = vmatpush1.msra.mxu0 %v160
  %1035 = vmatprep.subr.mxu0 %v165
  %1036 = vmatpush1.msra.mxu0 %v164
  %1037 = vmatprep.subr.mxu0 %v169
  %1038 = vmatpush1.msra.mxu0 %v168
  %1039 = vmatprep.subr.mxu0 %v173
  %1040 = vmatpush1.msra.mxu0 %v172
  %1041 = vmatprep.subr.mxu0 0.0
  %1042 = vmatpush1.msra.mxu0 0.0
  %1043 = vmatprep.subr.mxu0 0.0
  %1044 = vmatpush1.msra.mxu0 0.0
  %1045 = vmatprep.subr.mxu0 0.0
  %1046 = vmatpush1.msra.mxu0 0.0
  %1047 = vmatprep.subr.mxu0 0.0
  %1048 = vmatpush1.msra.mxu0 0.0
  %1049 = vmatprep.subr.mxu0 0.0
  %1050 = vmatpush1.msra.mxu0 0.0
  %1051 = vmatprep.subr.mxu0 0.0
  %1052 = vmatpush1.msra.mxu0 0.0
  %1053 = vmatprep.subr.mxu0 0.0
  %1054 = vmatpush1.msra.mxu0 0.0
  %1055 = vmatprep.subr.mxu0 0.0
  %1056 = vmatpush1.msra.mxu0 0.0
  %1057 = vmatprep.subr.mxu0 0.0
  %1058 = vmatpush1.msra.mxu0 0.0
  %1059 = vmatprep.subr.mxu0 0.0
  %1060 = vmatpush1.msra.mxu0 0.0
  %1061 = vmatprep.subr.mxu0 0.0
  %1062 = vmatpush1.msra.mxu0 0.0
  %1063 = vmatprep.subr.mxu0 0.0
  %1064 = vmatpush1.msra.mxu0 0.0
  %1065 = vmatprep.subr.mxu0 0.0
  %1066 = vmatpush1.msra.mxu0 0.0
  %1067 = vmatprep.subr.mxu0 0.0
  %1068 = vmatpush1.msra.mxu0 0.0
  %1069 = vmatprep.subr.mxu0 0.0
  %1070 = vmatpush1.msra.mxu0 0.0
  %1071 = vmatprep.subr.mxu0 0.0
  %1072 = vmatpush1.msra.mxu0 0.0
  %1073 = vmatprep.mubr.f32.mxu0 0.0
  %1074 = vmatmul.mubr.f32.gmra.mrb[0].mxu0 %v910
  %v1075 = vpop.f32.mrb[0].mxu0
  %v1076 = vadd.f32 0.0, %v1075
  %v1077 = vpop.f32.mrb[0].mxu0
  %v1078 = vadd.f32 0.0, %v1077
  %1079 = vdwg.mxu0
  %v1080 = vadd.f32 %v934, %v1005
  %v1081 = vadd.f32 %v935, %v1007
  %v1082 = vadd.f32 %v936, %v1076
  %v1083 = vadd.f32 %v937, %v1078
  %v1084 = vmul.f32 %v1080, 0.5
  %v1085 = vmul.f32 %v1081, 0.5
  %v1086 = vmul.f32 %v1082, 0.5
  %v1087 = vtanh.pop %v1084
  %v1088 = vtanh.pop %v1085
  %v1089 = vtanh.pop %v1086
  %v1090 = vadd.f32 %v1087, 1.0
  %v1091 = vadd.f32 %v1088, 1.0
  %v1092 = vadd.f32 %v1089, 1.0
  %v1093 = vmul.f32 %v1090, 0.5
  %v1094 = vmul.f32 %v1091, 0.5
  %v1095 = vmul.f32 %v1092, 0.5
  %v1096 = vtanh.pop %v1083
  %v1097 = vmul.f32 %v1094, %v908
  %v1098 = vmul.f32 %v1093, %v1096
  %v1099 = vadd.f32 %v1097, %v1098
  %v1100 = vtanh.pop %v1099
  %v1101 = vmul.f32 %v1095, %v1100
  %s1102 = scalar_lea.vmem %s0, 10
  %v1103 = vld [vmem:[%s1102] sm:$0x3]
  %1105 = vset.pattern.permute.xlu0 0
  %1106 = vperm.xlu0 %1105, %v1103
  %v1107 = vpop.permute.xlu0 %1106
  %v1109 = vmul.f32 %v1107, %v31
  %v1110 = vmul.f32 %v1107, %v35
  %v1111 = vmul.f32 %v1107, %v39
  %v1112 = vmul.f32 %v1107, %v43
  %1113 = vset.pattern.permute.xlu0 1
  %1114 = vperm.xlu0 %1113, %v1103
  %v1115 = vpop.permute.xlu0 %1114
  %v1117 = vmul.f32 %v1115, %v60
  %v1118 = vmul.f32 %v1115, %v64
  %v1119 = vmul.f32 %v1115, %v68
  %v1120 = vmul.f32 %v1115, %v72
  %v1121 = vadd.f32 %v1109, %v1117
  %v1122 = vadd.f32 %v1110, %v1118
  %v1123 = vadd.f32 %v1111, %v1119
  %v1124 = vadd.f32 %v1112, %v1120
  %v1125 = vadd.f32 %v1121, %v89
  %v1126 = vadd.f32 %v1122, %v93
  %v1127 = vadd.f32 %v1123, %v97
  %v1128 = vadd.f32 %v1124, %v101
  %1129 = vmatprep.subr.mxu0 %v111
  %1130 = vmatpush1.msra.mxu0 %v110
  %1131 = vmatprep.subr.mxu0 %v115
  %1132 = vmatpush1.msra.mxu0 %v114
  %1133 = vmatprep.subr.mxu0 %v119
  %1134 = vmatpush1.msra.mxu0 %v118
  %1135 = vmatprep.subr.mxu0 %v123
  %1136 = vmatpush1.msra.mxu0 %v122
  %1137 = vmatprep.subr.mxu0 %v127
  %1138 = vmatpush1.msra.mxu0 %v126
  %1139 = vmatprep.subr.mxu0 %v131
  %1140 = vmatpush1.msra.mxu0 %v130
  %1141 = vmatprep.subr.mxu0 %v135
  %1142 = vmatpush1.msra.mxu0 %v134
  %1143 = vmatprep.subr.mxu0 %v139
  %1144 = vmatpush1.msra.mxu0 %v138
  %1145 = vmatprep.subr.mxu0 %v143
  %1146 = vmatpush1.msra.mxu0 %v142
  %1147 = vmatprep.subr.mxu0 %v147
  %1148 = vmatpush1.msra.mxu0 %v146
  %1149 = vmatprep.subr.mxu0 %v151
  %1150 = vmatpush1.msra.mxu0 %v150
  %1151 = vmatprep.subr.mxu0 %v155
  %1152 = vmatpush1.msra.mxu0 %v154
  %1153 = vmatprep.subr.mxu0 %v159
  %1154 = vmatpush1.msra.mxu0 %v158
  %1155 = vmatprep.subr.mxu0 %v163
  %1156 = vmatpush1.msra.mxu0 %v162
  %1157 = vmatprep.subr.mxu0 %v167
  %1158 = vmatpush1.msra.mxu0 %v166
  %1159 = vmatprep.subr.mxu0 %v171
  %1160 = vmatpush1.msra.mxu0 %v170
  %1161 = vmatprep.subr.mxu0 0.0
  %1162 = vmatpush1.msra.mxu0 0.0
  %1163 = vmatprep.subr.mxu0 0.0
  %1164 = vmatpush1.msra.mxu0 0.0
  %1165 = vmatprep.subr.mxu0 0.0
  %1166 = vmatpush1.msra.mxu0 0.0
  %1167 = vmatprep.subr.mxu0 0.0
  %1168 = vmatpush1.msra.mxu0 0.0
  %1169 = vmatprep.subr.mxu0 0.0
  %1170 = vmatpush1.msra.mxu0 0.0
  %1171 = vmatprep.subr.mxu0 0.0
  %1172 = vmatpush1.msra.mxu0 0.0
  %1173 = vmatprep.subr.mxu0 0.0
  %1174 = vmatpush1.msra.mxu0 0.0
  %1175 = vmatprep.subr.mxu0 0.0
  %1176 = vmatpush1.msra.mxu0 0.0
  %1177 = vmatprep.subr.mxu0 0.0
  %1178 = vmatpush1.msra.mxu0 0.0
  %1179 = vmatprep.subr.mxu0 0.0
  %1180 = vmatpush1.msra.mxu0 0.0
  %1181 = vmatprep.subr.mxu0 0.0
  %1182 = vmatpush1.msra.mxu0 0.0
  %1183 = vmatprep.subr.mxu0 0.0
  %1184 = vmatpush1.msra.mxu0 0.0
  %1185 = vmatprep.subr.mxu0 0.0
  %1186 = vmatpush1.msra.mxu0 0.0
  %1187 = vmatprep.subr.mxu0 0.0
  %1188 = vmatpush1.msra.mxu0 0.0
  %1189 = vmatprep.subr.mxu0 0.0
  %1190 = vmatpush1.msra.mxu0 0.0
  %1191 = vmatprep.subr.mxu0 0.0
  %1192 = vmatpush1.msra.mxu0 0.0
  %1193 = vmatprep.mubr.f32.mxu0 0.0
  %1194 = vmatmul.mubr.f32.gmra.mrb[0].mxu0 %v1101
  %v1195 = vpop.f32.mrb[0].mxu0
  %v1196 = vadd.f32 0.0, %v1195
  %v1197 = vpop.f32.mrb[0].mxu0
  %v1198 = vadd.f32 0.0, %v1197
  %1199 = vdwg.mxu0
  %1200 = vmatprep.subr.mxu0 %v113
  %1201 = vmatpush1.msra.mxu0 %v112
  %1202 = vmatprep.subr.mxu0 %v117
  %1203 = vmatpush1.msra.mxu0 %v116
  %1204 = vmatprep.subr.mxu0 %v121
  %1205 = vmatpush1.msra.mxu0 %v120
  %1206 = vmatprep.subr.mxu0 %v125
  %1207 = vmatpush1.msra.mxu0 %v124
  %1208 = vmatprep.subr.mxu0 %v129
  %1209 = vmatpush1.msra.mxu0 %v128
  %1210 = vmatprep.subr.mxu0 %v133
  %1211 = vmatpush1.msra.mxu0 %v132
  %1212 = vmatprep.subr.mxu0 %v137
  %1213 = vmatpush1.msra.mxu0 %v136
  %1214 = vmatprep.subr.mxu0 %v141
  %1215 = vmatpush1.msra.mxu0 %v140
  %1216 = vmatprep.subr.mxu0 %v145
  %1217 = vmatpush1.msra.mxu0 %v144
  %1218 = vmatprep.subr.mxu0 %v149
  %1219 = vmatpush1.msra.mxu0 %v148
  %1220 = vmatprep.subr.mxu0 %v153
  %1221 = vmatpush1.msra.mxu0 %v152
  %1222 = vmatprep.subr.mxu0 %v157
  %1223 = vmatpush1.msra.mxu0 %v156
  %1224 = vmatprep.subr.mxu0 %v161
  %1225 = vmatpush1.msra.mxu0 %v160
  %1226 = vmatprep.subr.mxu0 %v165
  %1227 = vmatpush1.msra.mxu0 %v164
  %1228 = vmatprep.subr.mxu0 %v169
  %1229 = vmatpush1.msra.mxu0 %v168
  %1230 = vmatprep.subr.mxu0 %v173
  %1231 = vmatpush1.msra.mxu0 %v172
  %1232 = vmatprep.subr.mxu0 0.0
  %1233 = vmatpush1.msra.mxu0 0.0
  %1234 = vmatprep.subr.mxu0 0.0
  %1235 = vmatpush1.msra.mxu0 0.0
  %1236 = vmatprep.subr.mxu0 0.0
  %1237 = vmatpush1.msra.mxu0 0.0
  %1238 = vmatprep.subr.mxu0 0.0
  %1239 = vmatpush1.msra.mxu0 0.0
  %1240 = vmatprep.subr.mxu0 0.0
  %1241 = vmatpush1.msra.mxu0 0.0
  %1242 = vmatprep.subr.mxu0 0.0
  %1243 = vmatpush1.msra.mxu0 0.0
  %1244 = vmatprep.subr.mxu0 0.0
  %1245 = vmatpush1.msra.mxu0 0.0
  %1246 = vmatprep.subr.mxu0 0.0
  %1247 = vmatpush1.msra.mxu0 0.0
  %1248 = vmatprep.subr.mxu0 0.0
  %1249 = vmatpush1.msra.mxu0 0.0
  %1250 = vmatprep.subr.mxu0 0.0
  %1251 = vmatpush1.msra.mxu0 0.0
  %1252 = vmatprep.subr.mxu0 0.0
  %1253 = vmatpush1.msra.mxu0 0.0
  %1254 = vmatprep.subr.mxu0 0.0
  %1255 = vmatpush1.msra.mxu0 0.0
  %1256 = vmatprep.subr.mxu0 0.0
  %1257 = vmatpush1.msra.mxu0 0.0
  %1258 = vmatprep.subr.mxu0 0.0
  %1259 = vmatpush1.msra.mxu0 0.0
  %1260 = vmatprep.subr.mxu0 0.0
  %1261 = vmatpush1.msra.mxu0 0.0
  %1262 = vmatprep.subr.mxu0 0.0
  %1263 = vmatpush1.msra.mxu0 0.0
  %1264 = vmatprep.mubr.f32.mxu0 0.0
  %1265 = vmatmul.mubr.f32.gmra.mrb[0].mxu0 %v1101
  %v1266 = vpop.f32.mrb[0].mxu0
  %v1267 = vadd.f32 0.0, %v1266
  %v1268 = vpop.f32.mrb[0].mxu0
  %v1269 = vadd.f32 0.0, %v1268
  %1270 = vdwg.mxu0
  %v1271 = vadd.f32 %v1125, %v1196
  %v1272 = vadd.f32 %v1126, %v1198
  %v1273 = vadd.f32 %v1127, %v1267
  %v1274 = vadd.f32 %v1128, %v1269
  %v1275 = vmul.f32 %v1271, 0.5
  %v1276 = vmul.f32 %v1272, 0.5
  %v1277 = vmul.f32 %v1273, 0.5
  %v1278 = vtanh.pop %v1275
  %v1279 = vtanh.pop %v1276
  %v1280 = vtanh.pop %v1277
  %v1281 = vadd.f32 %v1278, 1.0
  %v1282 = vadd.f32 %v1279, 1.0
  %v1283 = vadd.f32 %v1280, 1.0
  %v1284 = vmul.f32 %v1281, 0.5
  %v1285 = vmul.f32 %v1282, 0.5
  %v1286 = vmul.f32 %v1283, 0.5
  %v1287 = vtanh.pop %v1274
  %v1288 = vmul.f32 %v1285, %v1099
  %v1289 = vmul.f32 %v1284, %v1287
  %v1290 = vadd.f32 %v1288, %v1289
  %v1291 = vtanh.pop %v1290
  %v1292 = vmul.f32 %v1286, %v1291
  %s1293 = scalar_lea.vmem %s0, 12
  %v1294 = vld [vmem:[%s1293] sm:$0x3]
  %1296 = vset.pattern.permute.xlu0 0
  %1297 = vperm.xlu0 %1296, %v1294
  %v1298 = vpop.permute.xlu0 %1297
  %v1300 = vmul.f32 %v1298, %v31
  %v1301 = vmul.f32 %v1298, %v35
  %v1302 = vmul.f32 %v1298, %v39
  %v1303 = vmul.f32 %v1298, %v43
  %1304 = vset.pattern.permute.xlu0 1
  %1305 = vperm.xlu0 %1304, %v1294
  %v1306 = vpop.permute.xlu0 %1305
  %v1308 = vmul.f32 %v1306, %v60
  %v1309 = vmul.f32 %v1306, %v64
  %v1310 = vmul.f32 %v1306, %v68
  %v1311 = vmul.f32 %v1306, %v72
  %v1312 = vadd.f32 %v1300, %v1308
  %v1313 = vadd.f32 %v1301, %v1309
  %v1314 = vadd.f32 %v1302, %v1310
  %v1315 = vadd.f32 %v1303, %v1311
  %v1316 = vadd.f32 %v1312, %v89
  %v1317 = vadd.f32 %v1313, %v93
  %v1318 = vadd.f32 %v1314, %v97
  %v1319 = vadd.f32 %v1315, %v101
  %1320 = vmatprep.subr.mxu0 %v111
  %1321 = vmatpush1.msra.mxu0 %v110
  %1322 = vmatprep.subr.mxu0 %v115
  %1323 = vmatpush1.msra.mxu0 %v114
  %1324 = vmatprep.subr.mxu0 %v119
  %1325 = vmatpush1.msra.mxu0 %v118
  %1326 = vmatprep.subr.mxu0 %v123
  %1327 = vmatpush1.msra.mxu0 %v122
  %1328 = vmatprep.subr.mxu0 %v127
  %1329 = vmatpush1.msra.mxu0 %v126
  %1330 = vmatprep.subr.mxu0 %v131
  %1331 = vmatpush1.msra.mxu0 %v130
  %1332 = vmatprep.subr.mxu0 %v135
  %1333 = vmatpush1.msra.mxu0 %v134
  %1334 = vmatprep.subr.mxu0 %v139
  %1335 = vmatpush1.msra.mxu0 %v138
  %1336 = vmatprep.subr.mxu0 %v143
  %1337 = vmatpush1.msra.mxu0 %v142
  %1338 = vmatprep.subr.mxu0 %v147
  %1339 = vmatpush1.msra.mxu0 %v146
  %1340 = vmatprep.subr.mxu0 %v151
  %1341 = vmatpush1.msra.mxu0 %v150
  %1342 = vmatprep.subr.mxu0 %v155
  %1343 = vmatpush1.msra.mxu0 %v154
  %1344 = vmatprep.subr.mxu0 %v159
  %1345 = vmatpush1.msra.mxu0 %v158
  %1346 = vmatprep.subr.mxu0 %v163
  %1347 = vmatpush1.msra.mxu0 %v162
  %1348 = vmatprep.subr.mxu0 %v167
  %1349 = vmatpush1.msra.mxu0 %v166
  %1350 = vmatprep.subr.mxu0 %v171
  %1351 = vmatpush1.msra.mxu0 %v170
  %1352 = vmatprep.subr.mxu0 0.0
  %1353 = vmatpush1.msra.mxu0 0.0
  %1354 = vmatprep.subr.mxu0 0.0
  %1355 = vmatpush1.msra.mxu0 0.0
  %1356 = vmatprep.subr.mxu0 0.0
  %1357 = vmatpush1.msra.mxu0 0.0
  %1358 = vmatprep.subr.mxu0 0.0
  %1359 = vmatpush1.msra.mxu0 0.0
  %1360 = vmatprep.subr.mxu0 0.0
  %1361 = vmatpush1.msra.mxu0 0.0
  %1362 = vmatprep.subr.mxu0 0.0
  %1363 = vmatpush1.msra.mxu0 0.0
  %1364 = vmatprep.subr.mxu0 0.0
  %1365 = vmatpush1.msra.mxu0 0.0
  %1366 = vmatprep.subr.mxu0 0.0
  %1367 = vmatpush1.msra.mxu0 0.0
  %1368 = vmatprep.subr.mxu0 0.0
  %1369 = vmatpush1.msra.mxu0 0.0
  %1370 = vmatprep.subr.mxu0 0.0
  %1371 = vmatpush1.msra.mxu0 0.0
  %1372 = vmatprep.subr.mxu0 0.0
  %1373 = vmatpush1.msra.mxu0 0.0
  %1374 = vmatprep.subr.mxu0 0.0
  %1375 = vmatpush1.msra.mxu0 0.0
  %1376 = vmatprep.subr.mxu0 0.0
  %1377 = vmatpush1.msra.mxu0 0.0
  %1378 = vmatprep.subr.mxu0 0.0
  %1379 = vmatpush1.msra.mxu0 0.0
  %1380 = vmatprep.subr.mxu0 0.0
  %1381 = vmatpush1.msra.mxu0 0.0
  %1382 = vmatprep.subr.mxu0 0.0
  %1383 = vmatpush1.msra.mxu0 0.0
  %1384 = vmatprep.mubr.f32.mxu0 0.0
  %1385 = vmatmul.mubr.f32.gmra.mrb[0].mxu0 %v1292
  %v1386 = vpop.f32.mrb[0].mxu0
  %v1387 = vadd.f32 0.0, %v1386
  %v1388 = vpop.f32.mrb[0].mxu0
  %v1389 = vadd.f32 0.0, %v1388
  %1390 = vdwg.mxu0
  %1391 = vmatprep.subr.mxu0 %v113
  %1392 = vmatpush1.msra.mxu0 %v112
  %1393 = vmatprep.subr.mxu0 %v117
  %1394 = vmatpush1.msra.mxu0 %v116
  %1395 = vmatprep.subr.mxu0 %v121
  %1396 = vmatpush1.msra.mxu0 %v120
  %1397 = vmatprep.subr.mxu0 %v125
  %1398 = vmatpush1.msra.mxu0 %v124
  %1399 = vmatprep.subr.mxu0 %v129
  %1400 = vmatpush1.msra.mxu0 %v128
  %1401 = vmatprep.subr.mxu0 %v133
  %1402 = vmatpush1.msra.mxu0 %v132
  %1403 = vmatprep.subr.mxu0 %v137
  %1404 = vmatpush1.msra.mxu0 %v136
  %1405 = vmatprep.subr.mxu0 %v141
  %1406 = vmatpush1.msra.mxu0 %v140
  %1407 = vmatprep.subr.mxu0 %v145
  %1408 = vmatpush1.msra.mxu0 %v144
  %1409 = vmatprep.subr.mxu0 %v149
  %1410 = vmatpush1.msra.mxu0 %v148
  %1411 = vmatprep.subr.mxu0 %v153
  %1412 = vmatpush1.msra.mxu0 %v152
  %1413 = vmatprep.subr.mxu0 %v157
  %1414 = vmatpush1.msra.mxu0 %v156
  %1415 = vmatprep.subr.mxu0 %v161
  %1416 = vmatpush1.msra.mxu0 %v160
  %1417 = vmatprep.subr.mxu0 %v165
  %1418 = vmatpush1.msra.mxu0 %v164
  %1419 = vmatprep.subr.mxu0 %v169
  %1420 = vmatpush1.msra.mxu0 %v168
  %1421 = vmatprep.subr.mxu0 %v173
  %1422 = vmatpush1.msra.mxu0 %v172
  %1423 = vmatprep.subr.mxu0 0.0
  %1424 = vmatpush1.msra.mxu0 0.0
  %1425 = vmatprep.subr.mxu0 0.0
  %1426 = vmatpush1.msra.mxu0 0.0
  %1427 = vmatprep.subr.mxu0 0.0
  %1428 = vmatpush1.msra.mxu0 0.0
  %1429 = vmatprep.subr.mxu0 0.0
  %1430 = vmatpush1.msra.mxu0 0.0
  %1431 = vmatprep.subr.mxu0 0.0
  %1432 = vmatpush1.msra.mxu0 0.0
  %1433 = vmatprep.subr.mxu0 0.0
  %1434 = vmatpush1.msra.mxu0 0.0
  %1435 = vmatprep.subr.mxu0 0.0
  %1436 = vmatpush1.msra.mxu0 0.0
  %1437 = vmatprep.subr.mxu0 0.0
  %1438 = vmatpush1.msra.mxu0 0.0
  %1439 = vmatprep.subr.mxu0 0.0
  %1440 = vmatpush1.msra.mxu0 0.0
  %1441 = vmatprep.subr.mxu0 0.0
  %1442 = vmatpush1.msra.mxu0 0.0
  %1443 = vmatprep.subr.mxu0 0.0
  %1444 = vmatpush1.msra.mxu0 0.0
  %1445 = vmatprep.subr.mxu0 0.0
  %1446 = vmatpush1.msra.mxu0 0.0
  %1447 = vmatprep.subr.mxu0 0.0
  %1448 = vmatpush1.msra.mxu0 0.0
  %1449 = vmatprep.subr.mxu0 0.0
  %1450 = vmatpush1.msra.mxu0 0.0
  %1451 = vmatprep.subr.mxu0 0.0
  %1452 = vmatpush1.msra.mxu0 0.0
  %1453 = vmatprep.subr.mxu0 0.0
  %1454 = vmatpush1.msra.mxu0 0.0
  %1455 = vmatprep.mubr.f32.mxu0 0.0
  %1456 = vmatmul.mubr.f32.gmra.mrb[0].mxu0 %v1292
  %v1457 = vpop.f32.mrb[0].mxu0
  %v1458 = vadd.f32 0.0, %v1457
  %v1459 = vpop.f32.mrb[0].mxu0
  %v1460 = vadd.f32 0.0, %v1459
  %1461 = vdwg.mxu0
  %v1462 = vadd.f32 %v1316, %v1387
  %v1463 = vadd.f32 %v1317, %v1389
  %v1464 = vadd.f32 %v1318, %v1458
  %v1465 = vadd.f32 %v1319, %v1460
  %v1466 = vmul.f32 %v1462, 0.5
  %v1467 = vmul.f32 %v1463, 0.5
  %v1468 = vmul.f32 %v1464, 0.5
  %v1469 = vtanh.pop %v1466
  %v1470 = vtanh.pop %v1467
  %v1471 = vtanh.pop %v1468
  %v1472 = vadd.f32 %v1469, 1.0
  %v1473 = vadd.f32 %v1470, 1.0
  %v1474 = vadd.f32 %v1471, 1.0
  %v1475 = vmul.f32 %v1472, 0.5
  %v1476 = vmul.f32 %v1473, 0.5
  %v1477 = vmul.f32 %v1474, 0.5
  %v1478 = vtanh.pop %v1465
  %v1479 = vmul.f32 %v1476, %v1290
  %v1480 = vmul.f32 %v1475, %v1478
  %v1481 = vadd.f32 %v1479, %v1480
  %v1482 = vtanh.pop %v1481
  %v1483 = vmul.f32 %v1477, %v1482
  %1484 = vst [vmem:[%s4] sm:$0x3] %v1483
  %s1485 = scalar_lea.vmem %s0, 14
  %v1486 = vld [vmem:[%s1485] sm:$0x3]
  %1488 = vset.pattern.permute.xlu0 0
  %1489 = vperm.xlu0 %1488, %v1486
  %v1490 = vpop.permute.xlu0 %1489
  %v1492 = vmul.f32 %v1490, %v31
  %v1493 = vmul.f32 %v1490, %v35
  %v1494 = vmul.f32 %v1490, %v39
  %v1495 = vmul.f32 %v1490, %v43
  %1496 = vset.pattern.permute.xlu0 1
  %1497 = vperm.xlu0 %1496, %v1486
  %v1498 = vpop.permute.xlu0 %1497
  %v1500 = vmul.f32 %v1498, %v60
  %v1501 = vmul.f32 %v1498, %v64
  %v1502 = vmul.f32 %v1498, %v68
  %v1503 = vmul.f32 %v1498, %v72
  %v1504 = vadd.f32 %v1492, %v1500
  %v1505 = vadd.f32 %v1493, %v1501
  %v1506 = vadd.f32 %v1494, %v1502
  %v1507 = vadd.f32 %v1495, %v1503
  %v1508 = vadd.f32 %v1504, %v89
  %v1509 = vadd.f32 %v1505, %v93
  %v1510 = vadd.f32 %v1506, %v97
  %v1511 = vadd.f32 %v1507, %v101
  %v1512 = vld [vmem:[%s2] sm:$0xff]
  %v1513 = vld [vmem:[%s2 + $0x8] sm:$0xff]
  %v1514 = vld [vmem:[%s2 + $0x10] sm:$0xff]
  %v1515 = vld [vmem:[%s2 + $0x18] sm:$0xff]
  %v1516 = vld [vmem:[%s2 + $0x20] sm:$0xff]
  %v1517 = vld [vmem:[%s2 + $0x28] sm:$0xff]
  %v1518 = vld [vmem:[%s2 + $0x30] sm:$0xff]
  %v1519 = vld [vmem:[%s2 + $0x38] sm:$0xff]
  %v1520 = vld [vmem:[%s2 + $0x40] sm:$0xff]
  %v1521 = vld [vmem:[%s2 + $0x48] sm:$0xff]
  %v1522 = vld [vmem:[%s2 + $0x50] sm:$0xff]
  %v1523 = vld [vmem:[%s2 + $0x58] sm:$0xff]
  %v1524 = vld [vmem:[%s2 + $0x60] sm:$0xff]
  %v1525 = vld [vmem:[%s2 + $0x68] sm:$0xff]
  %v1526 = vld [vmem:[%s2 + $0x70] sm:$0xff]
  %v1527 = vld [vmem:[%s2 + $0x78] sm:$0xff]
  %v1528 = vld [vmem:[%s2 + $0x80] sm:$0xff]
  %v1529 = vld [vmem:[%s2 + $0x88] sm:$0xff]
  %v1530 = vld [vmem:[%s2 + $0x90] sm:$0xff]
  %v1531 = vld [vmem:[%s2 + $0x98] sm:$0xff]
  %v1532 = vld [vmem:[%s2 + $0xa0] sm:$0xff]
  %v1533 = vld [vmem:[%s2 + $0xa8] sm:$0xff]
  %v1534 = vld [vmem:[%s2 + $0xb0] sm:$0xff]
  %v1535 = vld [vmem:[%s2 + $0xb8] sm:$0xff]
  %v1536 = vld [vmem:[%s2 + $0xc0] sm:$0xff]
  %v1537 = vld [vmem:[%s2 + $0xc8] sm:$0xff]
  %v1538 = vld [vmem:[%s2 + $0xd0] sm:$0xff]
  %v1539 = vld [vmem:[%s2 + $0xd8] sm:$0xff]
  %v1540 = vld [vmem:[%s2 + $0xe0] sm:$0xff]
  %v1541 = vld [vmem:[%s2 + $0xe8] sm:$0xff]
  %v1542 = vld [vmem:[%s2 + $0xf0] sm:$0xff]
  %v1543 = vld [vmem:[%s2 + $0xf8] sm:$0xff]
  %v1544 = vld [vmem:[%s2 + $0x100] sm:$0xff]
  %v1545 = vld [vmem:[%s2 + $0x108] sm:$0xff]
  %v1546 = vld [vmem:[%s2 + $0x110] sm:$0xff]
  %v1547 = vld [vmem:[%s2 + $0x118] sm:$0xff]
  %v1548 = vld [vmem:[%s2 + $0x120] sm:$0xff]
  %v1549 = vld [vmem:[%s2 + $0x128] sm:$0xff]
  %v1550 = vld [vmem:[%s2 + $0x130] sm:$0xff]
  %v1551 = vld [vmem:[%s2 + $0x138] sm:$0xff]
  %v1552 = vld [vmem:[%s2 + $0x140] sm:$0xff]
  %v1553 = vld [vmem:[%s2 + $0x148] sm:$0xff]
  %v1554 = vld [vmem:[%s2 + $0x150] sm:$0xff]
  %v1555 = vld [vmem:[%s2 + $0x158] sm:$0xff]
  %v1556 = vld [vmem:[%s2 + $0x160] sm:$0xff]
  %v1557 = vld [vmem:[%s2 + $0x168] sm:$0xff]
  %v1558 = vld [vmem:[%s2 + $0x170] sm:$0xff]
  %v1559 = vld [vmem:[%s2 + $0x178] sm:$0xff]
  %v1560 = vld [vmem:[%s2 + $0x180] sm:$0xff]
  %v1561 = vld [vmem:[%s2 + $0x188] sm:$0xff]
  %v1562 = vld [vmem:[%s2 + $0x190] sm:$0xff]
  %v1563 = vld [vmem:[%s2 + $0x198] sm:$0xff]
  %v1564 = vld [vmem:[%s2 + $0x1a0] sm:$0xff]
  %v1565 = vld [vmem:[%s2 + $0x1a8] sm:$0xff]
  %v1566 = vld [vmem:[%s2 + $0x1b0] sm:$0xff]
  %v1567 = vld [vmem:[%s2 + $0x1b8] sm:$0xff]
  %v1568 = vld [vmem:[%s2 + $0x1c0] sm:$0xff]
  %v1569 = vld [vmem:[%s2 + $0x1c8] sm:$0xff]
  %v1570 = vld [vmem:[%s2 + $0x1d0] sm:$0xff]
  %v1571 = vld [vmem:[%s2 + $0x1d8] sm:$0xff]
  %v1572 = vld [vmem:[%s2 + $0x1e0] sm:$0xff]
  %v1573 = vld [vmem:[%s2 + $0x1e8] sm:$0xff]
  %v1574 = vld [vmem:[%s2 + $0x1f0] sm:$0xff]
  %v1575 = vld [vmem:[%s2 + $0x1f8] sm:$0xff]
  %1576 = vmatprep.subr.mxu0 %v1513
  %1577 = vmatpush1.msra.mxu0 %v1512
  %1578 = vmatprep.subr.mxu0 %v1517
  %1579 = vmatpush1.msra.mxu0 %v1516
  %1580 = vmatprep.subr.mxu0 %v1521
  %1581 = vmatpush1.msra.mxu0 %v1520
  %1582 = vmatprep.subr.mxu0 %v1525
  %1583 = vmatpush1.msra.mxu0 %v1524
  %1584 = vmatprep.subr.mxu0 %v1529
  %1585 = vmatpush1.msra.mxu0 %v1528
  %1586 = vmatprep.subr.mxu0 %v1533
  %1587 = vmatpush1.msra.mxu0 %v1532
  %1588 = vmatprep.subr.mxu0 %v1537
  %1589 = vmatpush1.msra.mxu0 %v1536
  %1590 = vmatprep.subr.mxu0 %v1541
  %1591 = vmatpush1.msra.mxu0 %v1540
  %1592 = vmatprep.subr.mxu0 %v1545
  %1593 = vmatpush1.msra.mxu0 %v1544
  %1594 = vmatprep.subr.mxu0 %v1549
  %1595 = vmatpush1.msra.mxu0 %v1548
  %1596 = vmatprep.subr.mxu0 %v1553
  %1597 = vmatpush1.msra.mxu0 %v1552
  %1598 = vmatprep.subr.mxu0 %v1557
  %1599 = vmatpush1.msra.mxu0 %v1556
  %1600 = vmatprep.subr.mxu0 %v1561
  %1601 = vmatpush1.msra.mxu0 %v1560
  %1602 = vmatprep.subr.mxu0 %v1565
  %1603 = vmatpush1.msra.mxu0 %v1564
  %1604 = vmatprep.subr.mxu0 %v1569
  %1605 = vmatpush1.msra.mxu0 %v1568
  %1606 = vmatprep.subr.mxu0 %v1573
  %1607 = vmatpush1.msra.mxu0 %v1572
  %1608 = vmatprep.subr.mxu0 0.0
  %1609 = vmatpush1.msra.mxu0 0.0
  %1610 = vmatprep.subr.mxu0 0.0
  %1611 = vmatpush1.msra.mxu0 0.0
  %1612 = vmatprep.subr.mxu0 0.0
  %1613 = vmatpush1.msra.mxu0 0.0
  %1614 = vmatprep.subr.mxu0 0.0
  %1615 = vmatpush1.msra.mxu0 0.0
  %1616 = vmatprep.subr.mxu0 0.0
  %1617 = vmatpush1.msra.mxu0 0.0
  %1618 = vmatprep.subr.mxu0 0.0
  %1619 = vmatpush1.msra.mxu0 0.0
  %1620 = vmatprep.subr.mxu0 0.0
  %1621 = vmatpush1.msra.mxu0 0.0
  %1622 = vmatprep.subr.mxu0 0.0
  %1623 = vmatpush1.msra.mxu0 0.0
  %1624 = vmatprep.subr.mxu0 0.0
  %1625 = vmatpush1.msra.mxu0 0.0
  %1626 = vmatprep.subr.mxu0 0.0
  %1627 = vmatpush1.msra.mxu0 0.0
  %1628 = vmatprep.subr.mxu0 0.0
  %1629 = vmatpush1.msra.mxu0 0.0
  %1630 = vmatprep.subr.mxu0 0.0
  %1631 = vmatpush1.msra.mxu0 0.0
  %1632 = vmatprep.subr.mxu0 0.0
  %1633 = vmatpush1.msra.mxu0 0.0
  %1634 = vmatprep.subr.mxu0 0.0
  %1635 = vmatpush1.msra.mxu0 0.0
  %1636 = vmatprep.subr.mxu0 0.0
  %1637 = vmatpush1.msra.mxu0 0.0
  %1638 = vmatprep.subr.mxu0 0.0
  %1639 = vmatpush1.msra.mxu0 0.0
  %1640 = vmatprep.mubr.f32.mxu0 0.0
  %1641 = vmatmul.mubr.f32.gmra.mrb[0].mxu0 %v1483
  %v1642 = vpop.f32.mrb[0].mxu0
  %v1643 = vadd.f32 0.0, %v1642
  %v1644 = vpop.f32.mrb[0].mxu0
  %v1645 = vadd.f32 0.0, %v1644
  %1646 = vdwg.mxu0
  %1647 = vmatprep.subr.mxu0 %v1515
  %1648 = vmatpush1.msra.mxu0 %v1514
  %1649 = vmatprep.subr.mxu0 %v1519
  %1650 = vmatpush1.msra.mxu0 %v1518
  %1651 = vmatprep.subr.mxu0 %v1523
  %1652 = vmatpush1.msra.mxu0 %v1522
  %1653 = vmatprep.subr.mxu0 %v1527
  %1654 = vmatpush1.msra.mxu0 %v1526
  %1655 = vmatprep.subr.mxu0 %v1531
  %1656 = vmatpush1.msra.mxu0 %v1530
  %1657 = vmatprep.subr.mxu0 %v1535
  %1658 = vmatpush1.msra.mxu0 %v1534
  %1659 = vmatprep.subr.mxu0 %v1539
  %1660 = vmatpush1.msra.mxu0 %v1538
  %1661 = vmatprep.subr.mxu0 %v1543
  %1662 = vmatpush1.msra.mxu0 %v1542
  %1663 = vmatprep.subr.mxu0 %v1547
  %1664 = vmatpush1.msra.mxu0 %v1546
  %1665 = vmatprep.subr.mxu0 %v1551
  %1666 = vmatpush1.msra.mxu0 %v1550
  %1667 = vmatprep.subr.mxu0 %v1555
  %1668 = vmatpush1.msra.mxu0 %v1554
  %1669 = vmatprep.subr.mxu0 %v1559
  %1670 = vmatpush1.msra.mxu0 %v1558
  %1671 = vmatprep.subr.mxu0 %v1563
  %1672 = vmatpush1.msra.mxu0 %v1562
  %1673 = vmatprep.subr.mxu0 %v1567
  %1674 = vmatpush1.msra.mxu0 %v1566
  %1675 = vmatprep.subr.mxu0 %v1571
  %1676 = vmatpush1.msra.mxu0 %v1570
  %1677 = vmatprep.subr.mxu0 %v1575
  %1678 = vmatpush1.msra.mxu0 %v1574
  %1679 = vmatprep.subr.mxu0 0.0
  %1680 = vmatpush1.msra.mxu0 0.0
  %1681 = vmatprep.subr.mxu0 0.0
  %1682 = vmatpush1.msra.mxu0 0.0
  %1683 = vmatprep.subr.mxu0 0.0
  %1684 = vmatpush1.msra.mxu0 0.0
  %1685 = vmatprep.subr.mxu0 0.0
  %1686 = vmatpush1.msra.mxu0 0.0
  %1687 = vmatprep.subr.mxu0 0.0
  %1688 = vmatpush1.msra.mxu0 0.0
  %1689 = vmatprep.subr.mxu0 0.0
  %1690 = vmatpush1.msra.mxu0 0.0
  %1691 = vmatprep.subr.mxu0 0.0
  %1692 = vmatpush1.msra.mxu0 0.0
  %1693 = vmatprep.subr.mxu0 0.0
  %1694 = vmatpush1.msra.mxu0 0.0
  %1695 = vmatprep.subr.mxu0 0.0
  %1696 = vmatpush1.msra.mxu0 0.0
  %1697 = vmatprep.subr.mxu0 0.0
  %1698 = vmatpush1.msra.mxu0 0.0
  %1699 = vmatprep.subr.mxu0 0.0
  %1700 = vmatpush1.msra.mxu0 0.0
  %1701 = vmatprep.subr.mxu0 0.0
  %1702 = vmatpush1.msra.mxu0 0.0
  %1703 = vmatprep.subr.mxu0 0.0
  %1704 = vmatpush1.msra.mxu0 0.0
  %1705 = vmatprep.subr.mxu0 0.0
  %1706 = vmatpush1.msra.mxu0 0.0
  %1707 = vmatprep.subr.mxu0 0.0
  %1708 = vmatpush1.msra.mxu0 0.0
  %1709 = vmatprep.subr.mxu0 0.0
  %1710 = vmatpush1.msra.mxu0 0.0
  %1711 = vmatprep.mubr.f32.mxu0 0.0
  %1712 = vmatmul.mubr.f32.gmra.mrb[0].mxu0 %v1483
  %v1713 = vpop.f32.mrb[0].mxu0
  %v1714 = vadd.f32 0.0, %v1713
  %v1715 = vpop.f32.mrb[0].mxu0
  %v1716 = vadd.f32 0.0, %v1715
  %1717 = vdwg.mxu0
  %v1718 = vadd.f32 %v1508, %v1643
  %v1719 = vadd.f32 %v1509, %v1645
  %v1720 = vadd.f32 %v1510, %v1714
  %v1721 = vadd.f32 %v1511, %v1716
  %v1722 = vmul.f32 %v1718, 0.5
  %v1723 = vmul.f32 %v1719, 0.5
  %v1724 = vmul.f32 %v1720, 0.5
  %v1725 = vtanh.pop %v1722
  %v1726 = vtanh.pop %v1723
  %v1727 = vtanh.pop %v1724
  %v1728 = vadd.f32 %v1725, 1.0
  %v1729 = vadd.f32 %v1726, 1.0
  %v1730 = vadd.f32 %v1727, 1.0
  %v1731 = vmul.f32 %v1728, 0.5
  %v1732 = vmul.f32 %v1729, 0.5
  %v1733 = vmul.f32 %v1730, 0.5
  %v1734 = vtanh.pop %v1721
  %v1735 = vmul.f32 %v1732, %v1481
  %v1736 = vmul.f32 %v1731, %v1734
  %v1737 = vadd.f32 %v1735, %v1736
  %v1738 = vtanh.pop %v1737
  %v1739 = vmul.f32 %v1733, %v1738
  %s1740 = scalar_lea.vmem %s4, 2
  %1741 = vst [vmem:[%s1740] sm:$0x3] %v1739
  // Predicated region
  $region18: #{lstm_forward.1} parent=0 // pred_check
    _
  $region19: #{lstm_forward.1} parent=0 // pred_check_branch
    %1743 = sbr.rel (0) target = $region21
  $region20: #{lstm_forward.1} parent=0 // pred_region
    _
  $region21: #{lstm_forward.1} parent=0 // pred_fallthru
    _
  // Predicated region
  $region22: #{lstm_forward.1} parent=0 // pred_check
    _
  $region23: #{lstm_forward.1} parent=0 // pred_check_branch
    %1745 = sbr.rel (0) target = $region25
  $region24: #{lstm_forward.1} parent=0 // pred_region
    _
  $region25: #{lstm_forward.1} parent=0 // pred_fallthru
    _

</llo_original>
